<compile_context>
chip_gen: v7x
topology: tpu7x:2x2x1
jax: 0.10.0
libtpu: 0.0.40
codegen_flags: <defaults>
</compile_context>

<pallas_src>
import jax
import jax.numpy as jnp
import numpy as np
from jax.experimental import pallas as pl
from jax.experimental.pallas import tpu as pltpu

B = 2          # batch
C_IN = 512     # input channels (fixed by the module)
H = W = 12     # spatial size implied by the view(-1, 128*2*2)
C_CONV = 128   # conv2 output channels
HIDDEN = 32    # fc3 output
N_OUT = 2      # fc4 output
N_PAD = 128    # lane-padded fc4 output width


def cnn2_kernel(x_ref, wc_ref, bc_ref, w3_ref, b3_ref, w4_ref, b4_ref, out_ref):
    # x_ref: (9, B, 16, C_IN) bf16, pool-window-major (w = oh*3 + ow),
    #        the 16 pool taps sit on the sublane axis.

    # ---- AvgPool2d(4,4): one vectorized sublane reduction ---------------------
    # (the 1/16 scale is folded into wc; f32 adds keep v5e's VPU happy)
    x = x_ref[...].astype(jnp.float32)                  # (9, B, 16, 512)
    pooled = x.sum(axis=2).astype(jnp.bfloat16)         # (9, B, 512)

    # ---- Conv2d(512,128,k=2) + ReLU: single fused M=8 MXU matmul --------------
    # rows ordered (pos = oh*2+ow, b); cols ordered (kh, kw, cin) = wc row order
    patches = []
    for oh in range(2):
        for ow in range(2):
            patches.append(jnp.concatenate(
                [pooled[oh * 3 + ow],       pooled[oh * 3 + ow + 1],
                 pooled[(oh + 1) * 3 + ow], pooled[(oh + 1) * 3 + ow + 1]],
                axis=-1))                                # (B, 2048)
    patch_mat = jnp.concatenate(patches, axis=0)         # (4*B, 2048) = (8, 2048)

    y = jnp.dot(patch_mat, wc_ref[...], preferred_element_type=jnp.float32)
    y = jnp.maximum(y + bc_ref[...], 0.0)                # (8, 128) f32

    # ---- fc3 + ReLU: accumulate per-position blocks (no (B,512) concat) -------
    acc = jnp.zeros((B, HIDDEN), jnp.float32)
    for p in range(4):
        acc = acc + jnp.dot(y[p * B:(p + 1) * B, :], w3_ref[p],
                            preferred_element_type=jnp.float32)
    h3 = jnp.maximum(acc + b3_ref[...], 0.0)             # (B, 32)

    # ---- fc4 (lane-padded to 128 for a dense store) ---------------------------
    out_ref[...] = (jnp.dot(h3, w4_ref[...], preferred_element_type=jnp.float32)
                    + b4_ref[...])                       # (B, 128)


def cnn2_forward(x_nchw, params):
    conv_w, conv_b, fc3_w, fc3_b, fc4_w, fc4_b = params

    # (B, C, 12, 12) -> (oh, ow, b, i, j, c) -> (9, B, 16, C), bf16
    x_win = jnp.transpose(
        x_nchw.reshape(B, C_IN, 3, 4, 3, 4),   # (b, c, oh, i, ow, j)
        (2, 4, 0, 3, 5, 1),                    # (oh, ow, b, i, j, c)
    ).reshape(9, B, 16, C_IN).astype(jnp.bfloat16)

    # conv weight (Cout, Cin, kH, kW) -> rows ordered (kh, kw, cin): (2048, 128)
    # fold the 1/16 average-pool scale in, cast to bf16 for the MXU.
    wc = jnp.transpose(conv_w, (2, 3, 1, 0)).reshape(2 * 2 * C_IN, C_CONV)
    wc = (wc * (1.0 / 16.0)).astype(jnp.bfloat16)
    bc = conv_b.reshape(1, C_CONV)

    # fc3 weight (32, 512): torch flatten order is col = c*4 + pos; the kernel
    # consumes per-position (128, 32) blocks -> (4, 128, 32).
    w3 = jnp.transpose(fc3_w.reshape(HIDDEN, C_CONV, 4), (2, 1, 0))
    b3 = fc3_b.reshape(1, HIDDEN)

    # fc4: zero-pad the 2-wide output to 128 lanes for a dense store.
    w4 = jnp.zeros((HIDDEN, N_PAD), jnp.float32).at[:, :N_OUT].set(fc4_w.T)
    b4 = jnp.zeros((1, N_PAD), jnp.float32).at[:, :N_OUT].set(fc4_b)

    vmem = lambda: pl.BlockSpec(memory_space=pltpu.MemorySpace.VMEM)
    out_padded = pl.pallas_call(
        cnn2_kernel,
        out_shape=jax.ShapeDtypeStruct((B, N_PAD), jnp.float32),
        in_specs=[vmem() for _ in range(7)],
        out_specs=vmem(),
    )(x_win, wc, bc, w3, b3, w4, b4)
    return out_padded[:, :N_OUT]


def cnn2_reference(x_nchw, params):
    """Pure-JAX reference replicating the PyTorch forward exactly (f32)."""
    conv_w, conv_b, fc3_w, fc3_b, fc4_w, fc4_b = params
    b, c, h, w = x_nchw.shape
    p = x_nchw.reshape(b, c, h // 4, 4, w // 4, 4).mean(axis=(3, 5))   # AvgPool2d(4,4)
    y = jax.lax.conv_general_dilated(
        p, conv_w, window_strides=(1, 1), padding='VALID',
        dimension_numbers=('NCHW', 'OIHW', 'NCHW'))
    y = jnp.maximum(y + conv_b[None, :, None, None], 0.0)              # (B,128,2,2)
    v = y.reshape(b, C_CONV * 2 * 2)                                   # torch .view
    h3 = jnp.maximum(v @ fc3_w.T + fc3_b, 0.0)
    return h3 @ fc4_w.T + fc4_b


if __name__ == "__main__":
    key = jax.random.PRNGKey(0)
    keys = jax.random.split(key, 7)

    x = jax.random.normal(keys[0], (B, C_IN, H, W), jnp.float32)

    # deterministic synthetic parameters (shapes from CNN2.__init__)
    conv_w = jax.random.normal(keys[1], (C_CONV, C_IN, 2, 2), jnp.float32) * 0.02
    conv_b = jax.random.normal(keys[2], (C_CONV,), jnp.float32) * 0.02
    fc3_w = jax.random.normal(keys[3], (HIDDEN, 4 * C_CONV), jnp.float32) * 0.02
    fc3_b = jax.random.normal(keys[4], (HIDDEN,), jnp.float32) * 0.02
    fc4_w = jax.random.normal(keys[5], (N_OUT, HIDDEN), jnp.float32) * 0.02
    fc4_b = jax.random.normal(keys[6], (N_OUT,), jnp.float32) * 0.02
    params = (conv_w, conv_b, fc3_w, fc3_b, fc4_w, fc4_b)

    out = jax.block_until_ready(cnn2_forward(x, params))
    ref = cnn2_reference(x, params)

    assert out.shape == (B, N_OUT)
    # bf16 inputs/conv-weights vs f32 reference -> looser tolerance
    np.testing.assert_allclose(np.asarray(out), np.asarray(ref),
                               rtol=2e-2, atol=1e-2)
    print("KERNEL_OK")
</pallas_src>

<mosaic_0001>
module attributes {stable_mosaic.version = 11 : i64} {
  func.func @cnn2_kernel(%arg0: memref<9x2x16x512xbf16, #tpu.memory_space<vmem>>, %arg1: memref<2048x128xbf16, #tpu.memory_space<vmem>>, %arg2: memref<1x128xf32, #tpu.memory_space<vmem>>, %arg3: memref<4x128x32xf32, #tpu.memory_space<vmem>>, %arg4: memref<1x32xf32, #tpu.memory_space<vmem>>, %arg5: memref<32x128xf32, #tpu.memory_space<vmem>>, %arg6: memref<1x128xf32, #tpu.memory_space<vmem>>, %arg7: memref<2x128xf32, #tpu.memory_space<vmem>>) attributes {dimension_semantics = [], scalar_prefetch = 0 : i64, scratch_operands = 0 : i64, tpu.core_type = #tpu.core_type<tc>} {
    %c0 = arith.constant 0 : index
    %c0_0 = arith.constant 0 : index
    %c0_1 = arith.constant 0 : index
    %c0_2 = arith.constant 0 : index
    %0 = vector.load %arg0[%c0, %c0_0, %c0_1, %c0_2] : memref<9x2x16x512xbf16, #tpu.memory_space<vmem>>, vector<9x2x16x512xbf16>
    %1 = arith.extf %0 : vector<9x2x16x512xbf16> to vector<9x2x16x512xf32>
    %cst = arith.constant dense<0.000000e+00> : vector<9x2x512xf32>
    %2 = vector.multi_reduction <add>, %1, %cst [2] : vector<9x2x16x512xf32> to vector<9x2x512xf32>
    %3 = arith.truncf %2 : vector<9x2x512xf32> to vector<9x2x512xbf16>
    %4 = vector.extract_strided_slice %3 {offsets = [0, 0, 0], sizes = [1, 2, 512], strides = [1, 1, 1]} : vector<9x2x512xbf16> to vector<1x2x512xbf16>
    %5 = vector.shape_cast %4 : vector<1x2x512xbf16> to vector<2x512xbf16>
    %6 = vector.extract_strided_slice %3 {offsets = [1, 0, 0], sizes = [1, 2, 512], strides = [1, 1, 1]} : vector<9x2x512xbf16> to vector<1x2x512xbf16>
    %7 = vector.shape_cast %6 : vector<1x2x512xbf16> to vector<2x512xbf16>
    %8 = vector.extract_strided_slice %3 {offsets = [3, 0, 0], sizes = [1, 2, 512], strides = [1, 1, 1]} : vector<9x2x512xbf16> to vector<1x2x512xbf16>
    %9 = vector.shape_cast %8 : vector<1x2x512xbf16> to vector<2x512xbf16>
    %10 = vector.extract_strided_slice %3 {offsets = [4, 0, 0], sizes = [1, 2, 512], strides = [1, 1, 1]} : vector<9x2x512xbf16> to vector<1x2x512xbf16>
    %11 = vector.shape_cast %10 : vector<1x2x512xbf16> to vector<2x512xbf16>
    %12 = tpu.concatenate %5, %7, %9, %11 in 1 : vector<2x512xbf16>, vector<2x512xbf16>, vector<2x512xbf16>, vector<2x512xbf16> -> vector<2x2048xbf16>
    %13 = vector.extract_strided_slice %3 {offsets = [1, 0, 0], sizes = [1, 2, 512], strides = [1, 1, 1]} : vector<9x2x512xbf16> to vector<1x2x512xbf16>
    %14 = vector.shape_cast %13 : vector<1x2x512xbf16> to vector<2x512xbf16>
    %15 = vector.extract_strided_slice %3 {offsets = [2, 0, 0], sizes = [1, 2, 512], strides = [1, 1, 1]} : vector<9x2x512xbf16> to vector<1x2x512xbf16>
    %16 = vector.shape_cast %15 : vector<1x2x512xbf16> to vector<2x512xbf16>
    %17 = vector.extract_strided_slice %3 {offsets = [4, 0, 0], sizes = [1, 2, 512], strides = [1, 1, 1]} : vector<9x2x512xbf16> to vector<1x2x512xbf16>
    %18 = vector.shape_cast %17 : vector<1x2x512xbf16> to vector<2x512xbf16>
    %19 = vector.extract_strided_slice %3 {offsets = [5, 0, 0], sizes = [1, 2, 512], strides = [1, 1, 1]} : vector<9x2x512xbf16> to vector<1x2x512xbf16>
    %20 = vector.shape_cast %19 : vector<1x2x512xbf16> to vector<2x512xbf16>
    %21 = tpu.concatenate %14, %16, %18, %20 in 1 : vector<2x512xbf16>, vector<2x512xbf16>, vector<2x512xbf16>, vector<2x512xbf16> -> vector<2x2048xbf16>
    %22 = vector.extract_strided_slice %3 {offsets = [3, 0, 0], sizes = [1, 2, 512], strides = [1, 1, 1]} : vector<9x2x512xbf16> to vector<1x2x512xbf16>
    %23 = vector.shape_cast %22 : vector<1x2x512xbf16> to vector<2x512xbf16>
    %24 = vector.extract_strided_slice %3 {offsets = [4, 0, 0], sizes = [1, 2, 512], strides = [1, 1, 1]} : vector<9x2x512xbf16> to vector<1x2x512xbf16>
    %25 = vector.shape_cast %24 : vector<1x2x512xbf16> to vector<2x512xbf16>
    %26 = vector.extract_strided_slice %3 {offsets = [6, 0, 0], sizes = [1, 2, 512], strides = [1, 1, 1]} : vector<9x2x512xbf16> to vector<1x2x512xbf16>
    %27 = vector.shape_cast %26 : vector<1x2x512xbf16> to vector<2x512xbf16>
    %28 = vector.extract_strided_slice %3 {offsets = [7, 0, 0], sizes = [1, 2, 512], strides = [1, 1, 1]} : vector<9x2x512xbf16> to vector<1x2x512xbf16>
    %29 = vector.shape_cast %28 : vector<1x2x512xbf16> to vector<2x512xbf16>
    %30 = tpu.concatenate %23, %25, %27, %29 in 1 : vector<2x512xbf16>, vector<2x512xbf16>, vector<2x512xbf16>, vector<2x512xbf16> -> vector<2x2048xbf16>
    %31 = vector.extract_strided_slice %3 {offsets = [4, 0, 0], sizes = [1, 2, 512], strides = [1, 1, 1]} : vector<9x2x512xbf16> to vector<1x2x512xbf16>
    %32 = vector.shape_cast %31 : vector<1x2x512xbf16> to vector<2x512xbf16>
    %33 = vector.extract_strided_slice %3 {offsets = [5, 0, 0], sizes = [1, 2, 512], strides = [1, 1, 1]} : vector<9x2x512xbf16> to vector<1x2x512xbf16>
    %34 = vector.shape_cast %33 : vector<1x2x512xbf16> to vector<2x512xbf16>
    %35 = vector.extract_strided_slice %3 {offsets = [7, 0, 0], sizes = [1, 2, 512], strides = [1, 1, 1]} : vector<9x2x512xbf16> to vector<1x2x512xbf16>
    %36 = vector.shape_cast %35 : vector<1x2x512xbf16> to vector<2x512xbf16>
    %37 = vector.extract_strided_slice %3 {offsets = [8, 0, 0], sizes = [1, 2, 512], strides = [1, 1, 1]} : vector<9x2x512xbf16> to vector<1x2x512xbf16>
    %38 = vector.shape_cast %37 : vector<1x2x512xbf16> to vector<2x512xbf16>
    %39 = tpu.concatenate %32, %34, %36, %38 in 1 : vector<2x512xbf16>, vector<2x512xbf16>, vector<2x512xbf16>, vector<2x512xbf16> -> vector<2x2048xbf16>
    %40 = tpu.concatenate %12, %21, %30, %39 in 0 : vector<2x2048xbf16>, vector<2x2048xbf16>, vector<2x2048xbf16>, vector<2x2048xbf16> -> vector<8x2048xbf16>
    %c0_3 = arith.constant 0 : index
    %c0_4 = arith.constant 0 : index
    %41 = vector.load %arg1[%c0_3, %c0_4] : memref<2048x128xbf16, #tpu.memory_space<vmem>>, vector<2048x128xbf16>
    %cst_5 = arith.constant dense<0.000000e+00> : vector<8x128xf32>
    %42 = tpu.matmul %40, %41, %cst_5 {dimension_numbers = #tpu.dot_dimension_numbers<[1], [0], [0], [1], [0, 0, 1, 1], [], []>} : vector<8x2048xbf16>, vector<2048x128xbf16>, vector<8x128xf32> -> vector<8x128xf32>
    %c0_6 = arith.constant 0 : index
    %c0_7 = arith.constant 0 : index
    %43 = vector.load %arg2[%c0_6, %c0_7] : memref<1x128xf32, #tpu.memory_space<vmem>>, vector<1x128xf32>
    %44 = vector.broadcast %43 : vector<1x128xf32> to vector<8x128xf32>
    %45 = arith.addf %42, %44 : vector<8x128xf32>
    %cst_8 = arith.constant 0.000000e+00 : f32
    %46 = vector.broadcast %cst_8 : f32 to vector<8x128xf32>
    %47 = arith.maximumf %45, %46 : vector<8x128xf32>
    %cst_9 = arith.constant 0.000000e+00 : f32
    %48 = vector.broadcast %cst_9 : f32 to vector<2x32xf32>
    %49 = vector.extract_strided_slice %47 {offsets = [0, 0], sizes = [2, 128], strides = [1, 1]} : vector<8x128xf32> to vector<2x128xf32>
    %c0_10 = arith.constant 0 : index
    %c0_11 = arith.constant 0 : index
    %c0_12 = arith.constant 0 : index
    %50 = vector.load %arg3[%c0_10, %c0_11, %c0_12] : memref<4x128x32xf32, #tpu.memory_space<vmem>>, vector<1x128x32xf32>
    %51 = vector.shape_cast %50 : vector<1x128x32xf32> to vector<128x32xf32>
    %cst_13 = arith.constant dense<0.000000e+00> : vector<2x32xf32>
    %52 = tpu.matmul %49, %51, %cst_13 {dimension_numbers = #tpu.dot_dimension_numbers<[1], [0], [0], [1], [0, 0, 1, 1], [], []>} : vector<2x128xf32>, vector<128x32xf32>, vector<2x32xf32> -> vector<2x32xf32>
    %53 = arith.addf %48, %52 : vector<2x32xf32>
    %54 = vector.extract_strided_slice %47 {offsets = [2, 0], sizes = [2, 128], strides = [1, 1]} : vector<8x128xf32> to vector<2x128xf32>
    %c1 = arith.constant 1 : index
    %c0_14 = arith.constant 0 : index
    %c0_15 = arith.constant 0 : index
    %55 = vector.load %arg3[%c1, %c0_14, %c0_15] : memref<4x128x32xf32, #tpu.memory_space<vmem>>, vector<1x128x32xf32>
    %56 = vector.shape_cast %55 : vector<1x128x32xf32> to vector<128x32xf32>
    %cst_16 = arith.constant dense<0.000000e+00> : vector<2x32xf32>
    %57 = tpu.matmul %54, %56, %cst_16 {dimension_numbers = #tpu.dot_dimension_numbers<[1], [0], [0], [1], [0, 0, 1, 1], [], []>} : vector<2x128xf32>, vector<128x32xf32>, vector<2x32xf32> -> vector<2x32xf32>
    %58 = arith.addf %53, %57 : vector<2x32xf32>
    %59 = vector.extract_strided_slice %47 {offsets = [4, 0], sizes = [2, 128], strides = [1, 1]} : vector<8x128xf32> to vector<2x128xf32>
    %c2 = arith.constant 2 : index
    %c0_17 = arith.constant 0 : index
    %c0_18 = arith.constant 0 : index
    %60 = vector.load %arg3[%c2, %c0_17, %c0_18] : memref<4x128x32xf32, #tpu.memory_space<vmem>>, vector<1x128x32xf32>
    %61 = vector.shape_cast %60 : vector<1x128x32xf32> to vector<128x32xf32>
    %cst_19 = arith.constant dense<0.000000e+00> : vector<2x32xf32>
    %62 = tpu.matmul %59, %61, %cst_19 {dimension_numbers = #tpu.dot_dimension_numbers<[1], [0], [0], [1], [0, 0, 1, 1], [], []>} : vector<2x128xf32>, vector<128x32xf32>, vector<2x32xf32> -> vector<2x32xf32>
    %63 = arith.addf %58, %62 : vector<2x32xf32>
    %64 = vector.extract_strided_slice %47 {offsets = [6, 0], sizes = [2, 128], strides = [1, 1]} : vector<8x128xf32> to vector<2x128xf32>
    %c3 = arith.constant 3 : index
    %c0_20 = arith.constant 0 : index
    %c0_21 = arith.constant 0 : index
    %65 = vector.load %arg3[%c3, %c0_20, %c0_21] : memref<4x128x32xf32, #tpu.memory_space<vmem>>, vector<1x128x32xf32>
    %66 = vector.shape_cast %65 : vector<1x128x32xf32> to vector<128x32xf32>
    %cst_22 = arith.constant dense<0.000000e+00> : vector<2x32xf32>
    %67 = tpu.matmul %64, %66, %cst_22 {dimension_numbers = #tpu.dot_dimension_numbers<[1], [0], [0], [1], [0, 0, 1, 1], [], []>} : vector<2x128xf32>, vector<128x32xf32>, vector<2x32xf32> -> vector<2x32xf32>
    %68 = arith.addf %63, %67 : vector<2x32xf32>
    %c0_23 = arith.constant 0 : index
    %c0_24 = arith.constant 0 : index
    %69 = vector.load %arg4[%c0_23, %c0_24] : memref<1x32xf32, #tpu.memory_space<vmem>>, vector<1x32xf32>
    %70 = vector.broadcast %69 : vector<1x32xf32> to vector<2x32xf32>
    %71 = arith.addf %68, %70 : vector<2x32xf32>
    %cst_25 = arith.constant 0.000000e+00 : f32
    %72 = vector.broadcast %cst_25 : f32 to vector<2x32xf32>
    %73 = arith.maximumf %71, %72 : vector<2x32xf32>
    %c0_26 = arith.constant 0 : index
    %c0_27 = arith.constant 0 : index
    %74 = vector.load %arg5[%c0_26, %c0_27] : memref<32x128xf32, #tpu.memory_space<vmem>>, vector<32x128xf32>
    %cst_28 = arith.constant dense<0.000000e+00> : vector<2x128xf32>
    %75 = tpu.matmul %73, %74, %cst_28 {dimension_numbers = #tpu.dot_dimension_numbers<[1], [0], [0], [1], [0, 0, 1, 1], [], []>} : vector<2x32xf32>, vector<32x128xf32>, vector<2x128xf32> -> vector<2x128xf32>
    %c0_29 = arith.constant 0 : index
    %c0_30 = arith.constant 0 : index
    %76 = vector.load %arg6[%c0_29, %c0_30] : memref<1x128xf32, #tpu.memory_space<vmem>>, vector<1x128xf32>
    %77 = vector.broadcast %76 : vector<1x128xf32> to vector<2x128xf32>
    %78 = arith.addf %75, %77 : vector<2x128xf32>
    %c0_31 = arith.constant 0 : index
    %c0_32 = arith.constant 0 : index
    %79 = vector.load %arg7[%c0_31, %c0_32] : memref<2x128xf32, #tpu.memory_space<vmem>>, vector<2x128xf32>
    tpu.vector_store %arg7[%c0_31, %c0_32], %78 {strides = array<i32>} : memref<2x128xf32, #tpu.memory_space<vmem>>, vector<2x128xf32>,
    return
  }
}

</mosaic_0001>

<llo_original>
// kernel: tpu_custom_call.1
$region0: #{tpu_custom_call.1}
  #allocation0 [shape = 'u32[]', space=smem, size = 0x4, offset = 0x4, fixed_abs, tag = 'smem constant byte address 0x4 - core index']
  #allocation1 [shape = 'u32[144,128]{1,0:T(1,128)}', space=vmem, size = 0x12000, scoped, tag = 'internal scratch']
  %s0 = inlined_call_operand.vmem [shape: bf16[9,2,16,512], index: 0, kind: input, shape index: {}]
  %s1 = inlined_call_operand.hbm [shape: bf16[2048,128], index: 1, kind: input, shape index: {}]
  %s2 = inlined_call_operand.vmem [shape: f32[1,128], index: 2, kind: input, shape index: {}]
  %s3 = inlined_call_operand.vmem [shape: f32[4,128,32], index: 3, kind: input, shape index: {}]
  %s4 = inlined_call_operand.vmem [shape: f32[1,32], index: 4, kind: input, shape index: {}]
  %s5 = inlined_call_operand.vmem [shape: f32[32,128], index: 5, kind: input, shape index: {}]
  %s6 = inlined_call_operand.vmem [shape: f32[1,128], index: 6, kind: input, shape index: {}]
  %s7 = inlined_call_operand.hbm [shape: f32[2,128], index: 7, kind: output, shape index: {}]
  %s8 = sld [smem:[#allocation0]]
  $region42: #{tpu_custom_call.1} parent=0
    _
  %s10 = ssub.s32 1, %s8
  %s11 = scalar_select 0, %s10, %s8
  $region1: #{tpu_custom_call.1} parent=0
    #allocation2 [shape = 'u8[524288]{0}', space=vmem, size = 0x80000, scoped, tag = 'input window, operand 1, single buffered']
    #allocation3 [shape = 's32[1]{0}', space=sflag, size = 0x4, scoped, tag = 'scoped memory for tpu_custom_call.1']
    #allocation4 [shape = 's32[1]{0}', space=sflag, size = 0x4, scoped, tag = 'scoped memory for tpu_custom_call.1']
    #allocation5 [shape = 'u8[1024]{0}', space=vmem, size = 0x400, scoped, tag = 'output window, operand 0, single buffered']
    %12 = vsyncpa [#allocation3], 0
    %13 = vsyncpa [#allocation4], 0
    // Predicated region
    $region2: #{tpu_custom_call.1} parent=1 // pred_check
      _
    $region3: #{tpu_custom_call.1} parent=1 // pred_check_branch
      %15 = sbr.rel (0) target = $region5
    $region4: #{tpu_custom_call.1} parent=1 // pred_region
      _
    $region5: #{tpu_custom_call.1} parent=1 // pred_fallthru
      _
    // Predicated region
    $region6: #{tpu_custom_call.1} parent=1 // pred_check
      _
    $region7: #{tpu_custom_call.1} parent=1 // pred_check_branch
      %17 = sbr.rel (0) target = $region9
    $region8: #{tpu_custom_call.1} parent=1 // pred_region
      %s19 = ssub.s32 16384, 16384
      %20 = vsyncadd [#allocation3], %s19
      %s21 = sshll.u32 [#allocation2], 4
      %s22 = int_to_ptr.vmem [resolvable:$true] %s21
      %27 = dma.hbm_to_vmem [thread:$0]  %s1, 16384, %s22, [#allocation3], 64, 64, 4
    $region9: #{tpu_custom_call.1} parent=1 // pred_fallthru
      _
    // Predicated region
    $region10: #{tpu_custom_call.1} parent=1 // pred_check
      _
    $region11: #{tpu_custom_call.1} parent=1 // pred_check_branch
      %29 = sbr.rel (0) target = $region13
    $region12: #{tpu_custom_call.1} parent=1 // pred_region
      _
    $region13: #{tpu_custom_call.1} parent=1 // pred_fallthru
      _
    // Predicated region
    $region14: #{tpu_custom_call.1} parent=1 // pred_check
      _
    $region15: #{tpu_custom_call.1} parent=1 // pred_check_branch
      %31 = sbr.rel (0) target = $region17
    $region16: #{tpu_custom_call.1} parent=1 // pred_region
      _
    $region17: #{tpu_custom_call.1} parent=1 // pred_fallthru
      _
    // Predicated region
    $region18: #{tpu_custom_call.1} parent=1 // pred_check
      _
    $region19: #{tpu_custom_call.1} parent=1 // pred_check_branch
      %33 = sbr.rel (0) target = $region21
    $region20: #{tpu_custom_call.1} parent=1 // pred_region
      _
    $region21: #{tpu_custom_call.1} parent=1 // pred_fallthru
      _
    // Predicated region
    $region22: #{tpu_custom_call.1} parent=1 // pred_check
      _
    $region23: #{tpu_custom_call.1} parent=1 // pred_check_branch
      %35 = sbr.rel (0) target = $region25
    $region24: #{tpu_custom_call.1} parent=1 // pred_region
      _
    $region25: #{tpu_custom_call.1} parent=1 // pred_fallthru
      _
    // Predicated region
    $region26: #{tpu_custom_call.1} parent=1 // pred_check
      _
    $region27: #{tpu_custom_call.1} parent=1 // pred_check_branch
      %37 = sbr.rel (0) target = $region29
    $region28: #{tpu_custom_call.1} parent=1 // pred_region
      _
    $region29: #{tpu_custom_call.1} parent=1 // pred_fallthru
      _
    // Predicated region
    $region30: #{tpu_custom_call.1} parent=1 // pred_check
      _
    $region31: #{tpu_custom_call.1} parent=1 // pred_check_branch
      %39 = sbr.rel (0) target = $region33
    $region32: #{tpu_custom_call.1} parent=1 // pred_region
      %40 = dma.done [#allocation3], 16384
    $region33: #{tpu_custom_call.1} parent=1 // pred_fallthru
      _
    %v42 = vld [vmem:[%s0] sm:$0xff]
    %v43 = vld [vmem:[%s0 + $0x8] sm:$0xff]
    %v44 = vld [vmem:[%s0 + $0x10] sm:$0xff]
    %v45 = vld [vmem:[%s0 + $0x18] sm:$0xff]
    %v46 = vld [vmem:[%s0 + $0x20] sm:$0xff]
    %v47 = vld [vmem:[%s0 + $0x28] sm:$0xff]
    %v48 = vld [vmem:[%s0 + $0x30] sm:$0xff]
    %v49 = vld [vmem:[%s0 + $0x38] sm:$0xff]
    %v50 = vld [vmem:[%s0 + $0x40] sm:$0xff]
    %v51 = vld [vmem:[%s0 + $0x48] sm:$0xff]
    %v52 = vld [vmem:[%s0 + $0x50] sm:$0xff]
    %v53 = vld [vmem:[%s0 + $0x58] sm:$0xff]
    %v54 = vld [vmem:[%s0 + $0x60] sm:$0xff]
    %v55 = vld [vmem:[%s0 + $0x68] sm:$0xff]
    %v56 = vld [vmem:[%s0 + $0x70] sm:$0xff]
    %v57 = vld [vmem:[%s0 + $0x78] sm:$0xff]
    %v58 = vld [vmem:[%s0 + $0x80] sm:$0xff]
    %v59 = vld [vmem:[%s0 + $0x88] sm:$0xff]
    %v60 = vld [vmem:[%s0 + $0x90] sm:$0xff]
    %v61 = vld [vmem:[%s0 + $0x98] sm:$0xff]
    %v62 = vld [vmem:[%s0 + $0xa0] sm:$0xff]
    %v63 = vld [vmem:[%s0 + $0xa8] sm:$0xff]
    %v64 = vld [vmem:[%s0 + $0xb0] sm:$0xff]
    %v65 = vld [vmem:[%s0 + $0xb8] sm:$0xff]
    %v66 = vld [vmem:[%s0 + $0xc0] sm:$0xff]
    %v67 = vld [vmem:[%s0 + $0xc8] sm:$0xff]
    %v68 = vld [vmem:[%s0 + $0xd0] sm:$0xff]
    %v69 = vld [vmem:[%s0 + $0xd8] sm:$0xff]
    %v70 = vld [vmem:[%s0 + $0xe0] sm:$0xff]
    %v71 = vld [vmem:[%s0 + $0xe8] sm:$0xff]
    %v72 = vld [vmem:[%s0 + $0xf0] sm:$0xff]
    %v73 = vld [vmem:[%s0 + $0xf8] sm:$0xff]
    %v74 = vld [vmem:[%s0 + $0x100] sm:$0xff]
    %v75 = vld [vmem:[%s0 + $0x108] sm:$0xff]
    %v76 = vld [vmem:[%s0 + $0x110] sm:$0xff]
    %v77 = vld [vmem:[%s0 + $0x118] sm:$0xff]
    %v78 = vld [vmem:[%s0 + $0x120] sm:$0xff]
    %v79 = vld [vmem:[%s0 + $0x128] sm:$0xff]
    %v80 = vld [vmem:[%s0 + $0x130] sm:$0xff]
    %v81 = vld [vmem:[%s0 + $0x138] sm:$0xff]
    %v82 = vld [vmem:[%s0 + $0x140] sm:$0xff]
    %v83 = vld [vmem:[%s0 + $0x148] sm:$0xff]
    %v84 = vld [vmem:[%s0 + $0x150] sm:$0xff]
    %v85 = vld [vmem:[%s0 + $0x158] sm:$0xff]
    %v86 = vld [vmem:[%s0 + $0x160] sm:$0xff]
    %v87 = vld [vmem:[%s0 + $0x168] sm:$0xff]
    %v88 = vld [vmem:[%s0 + $0x170] sm:$0xff]
    %v89 = vld [vmem:[%s0 + $0x178] sm:$0xff]
    %v90 = vld [vmem:[%s0 + $0x180] sm:$0xff]
    %v91 = vld [vmem:[%s0 + $0x188] sm:$0xff]
    %v92 = vld [vmem:[%s0 + $0x190] sm:$0xff]
    %v93 = vld [vmem:[%s0 + $0x198] sm:$0xff]
    %v94 = vld [vmem:[%s0 + $0x1a0] sm:$0xff]
    %v95 = vld [vmem:[%s0 + $0x1a8] sm:$0xff]
    %v96 = vld [vmem:[%s0 + $0x1b0] sm:$0xff]
    %v97 = vld [vmem:[%s0 + $0x1b8] sm:$0xff]
    %v98 = vld [vmem:[%s0 + $0x1c0] sm:$0xff]
    %v99 = vld [vmem:[%s0 + $0x1c8] sm:$0xff]
    %v100 = vld [vmem:[%s0 + $0x1d0] sm:$0xff]
    %v101 = vld [vmem:[%s0 + $0x1d8] sm:$0xff]
    %v102 = vld [vmem:[%s0 + $0x1e0] sm:$0xff]
    %v103 = vld [vmem:[%s0 + $0x1e8] sm:$0xff]
    %v104 = vld [vmem:[%s0 + $0x1f0] sm:$0xff]
    %v105 = vld [vmem:[%s0 + $0x1f8] sm:$0xff]
    %v106 = vld [vmem:[%s0 + $0x200] sm:$0xff]
    %v107 = vld [vmem:[%s0 + $0x208] sm:$0xff]
    %v108 = vld [vmem:[%s0 + $0x210] sm:$0xff]
    %v109 = vld [vmem:[%s0 + $0x218] sm:$0xff]
    %v110 = vld [vmem:[%s0 + $0x220] sm:$0xff]
    %v111 = vld [vmem:[%s0 + $0x228] sm:$0xff]
    %v112 = vld [vmem:[%s0 + $0x230] sm:$0xff]
    %v113 = vld [vmem:[%s0 + $0x238] sm:$0xff]
    %v114 = vunpack.c.l.bf16 %v42
    %v115 = vunpack.c.h.bf16 %v42
    %v116 = vunpack.c.l.bf16 %v43
    %v117 = vunpack.c.h.bf16 %v43
    %v118 = vunpack.c.l.bf16 %v44
    %v119 = vunpack.c.h.bf16 %v44
    %v120 = vunpack.c.l.bf16 %v45
    %v121 = vunpack.c.h.bf16 %v45
    %v122 = vunpack.c.l.bf16 %v46
    %v123 = vunpack.c.h.bf16 %v46
    %v124 = vunpack.c.l.bf16 %v47
    %v125 = vunpack.c.h.bf16 %v47
    %v126 = vunpack.c.l.bf16 %v48
    %v127 = vunpack.c.h.bf16 %v48
    %v128 = vunpack.c.l.bf16 %v49
    %v129 = vunpack.c.h.bf16 %v49
    %v130 = vunpack.c.l.bf16 %v50
    %v131 = vunpack.c.h.bf16 %v50
    %v132 = vunpack.c.l.bf16 %v51
    %v133 = vunpack.c.h.bf16 %v51
    %v134 = vunpack.c.l.bf16 %v52
    %v135 = vunpack.c.h.bf16 %v52
    %v136 = vunpack.c.l.bf16 %v53
    %v137 = vunpack.c.h.bf16 %v53
    %v138 = vunpack.c.l.bf16 %v54
    %v139 = vunpack.c.h.bf16 %v54
    %v140 = vunpack.c.l.bf16 %v55
    %v141 = vunpack.c.h.bf16 %v55
    %v142 = vunpack.c.l.bf16 %v56
    %v143 = vunpack.c.h.bf16 %v56
    %v144 = vunpack.c.l.bf16 %v57
    %v145 = vunpack.c.h.bf16 %v57
    %v146 = vunpack.c.l.bf16 %v58
    %v147 = vunpack.c.h.bf16 %v58
    %v148 = vunpack.c.l.bf16 %v59
    %v149 = vunpack.c.h.bf16 %v59
    %v150 = vunpack.c.l.bf16 %v60
    %v151 = vunpack.c.h.bf16 %v60
    %v152 = vunpack.c.l.bf16 %v61
    %v153 = vunpack.c.h.bf16 %v61
    %v154 = vunpack.c.l.bf16 %v62
    %v155 = vunpack.c.h.bf16 %v62
    %v156 = vunpack.c.l.bf16 %v63
    %v157 = vunpack.c.h.bf16 %v63
    %v158 = vunpack.c.l.bf16 %v64
    %v159 = vunpack.c.h.bf16 %v64
    %v160 = vunpack.c.l.bf16 %v65
    %v161 = vunpack.c.h.bf16 %v65
    %v162 = vunpack.c.l.bf16 %v66
    %v163 = vunpack.c.h.bf16 %v66
    %v164 = vunpack.c.l.bf16 %v67
    %v165 = vunpack.c.h.bf16 %v67
    %v166 = vunpack.c.l.bf16 %v68
    %v167 = vunpack.c.h.bf16 %v68
    %v168 = vunpack.c.l.bf16 %v69
    %v169 = vunpack.c.h.bf16 %v69
    %v170 = vunpack.c.l.bf16 %v70
    %v171 = vunpack.c.h.bf16 %v70
    %v172 = vunpack.c.l.bf16 %v71
    %v173 = vunpack.c.h.bf16 %v71
    %v174 = vunpack.c.l.bf16 %v72
    %v175 = vunpack.c.h.bf16 %v72
    %v176 = vunpack.c.l.bf16 %v73
    %v177 = vunpack.c.h.bf16 %v73
    %v178 = vunpack.c.l.bf16 %v74
    %v179 = vunpack.c.h.bf16 %v74
    %v180 = vunpack.c.l.bf16 %v75
    %v181 = vunpack.c.h.bf16 %v75
    %v182 = vunpack.c.l.bf16 %v76
    %v183 = vunpack.c.h.bf16 %v76
    %v184 = vunpack.c.l.bf16 %v77
    %v185 = vunpack.c.h.bf16 %v77
    %v186 = vunpack.c.l.bf16 %v78
    %v187 = vunpack.c.h.bf16 %v78
    %v188 = vunpack.c.l.bf16 %v79
    %v189 = vunpack.c.h.bf16 %v79
    %v190 = vunpack.c.l.bf16 %v80
    %v191 = vunpack.c.h.bf16 %v80
    %v192 = vunpack.c.l.bf16 %v81
    %v193 = vunpack.c.h.bf16 %v81
    %v194 = vunpack.c.l.bf16 %v82
    %v195 = vunpack.c.h.bf16 %v82
    %v196 = vunpack.c.l.bf16 %v83
    %v197 = vunpack.c.h.bf16 %v83
    %v198 = vunpack.c.l.bf16 %v84
    %v199 = vunpack.c.h.bf16 %v84
    %v200 = vunpack.c.l.bf16 %v85
    %v201 = vunpack.c.h.bf16 %v85
    %v202 = vunpack.c.l.bf16 %v86
    %v203 = vunpack.c.h.bf16 %v86
    %v204 = vunpack.c.l.bf16 %v87
    %v205 = vunpack.c.h.bf16 %v87
    %v206 = vunpack.c.l.bf16 %v88
    %v207 = vunpack.c.h.bf16 %v88
    %v208 = vunpack.c.l.bf16 %v89
    %v209 = vunpack.c.h.bf16 %v89
    %v210 = vunpack.c.l.bf16 %v90
    %v211 = vunpack.c.h.bf16 %v90
    %v212 = vunpack.c.l.bf16 %v91
    %v213 = vunpack.c.h.bf16 %v91
    %v214 = vunpack.c.l.bf16 %v92
    %v215 = vunpack.c.h.bf16 %v92
    %v216 = vunpack.c.l.bf16 %v93
    %v217 = vunpack.c.h.bf16 %v93
    %v218 = vunpack.c.l.bf16 %v94
    %v219 = vunpack.c.h.bf16 %v94
    %v220 = vunpack.c.l.bf16 %v95
    %v221 = vunpack.c.h.bf16 %v95
    %v222 = vunpack.c.l.bf16 %v96
    %v223 = vunpack.c.h.bf16 %v96
    %v224 = vunpack.c.l.bf16 %v97
    %v225 = vunpack.c.h.bf16 %v97
    %v226 = vunpack.c.l.bf16 %v98
    %v227 = vunpack.c.h.bf16 %v98
    %v228 = vunpack.c.l.bf16 %v99
    %v229 = vunpack.c.h.bf16 %v99
    %v230 = vunpack.c.l.bf16 %v100
    %v231 = vunpack.c.h.bf16 %v100
    %v232 = vunpack.c.l.bf16 %v101
    %v233 = vunpack.c.h.bf16 %v101
    %v234 = vunpack.c.l.bf16 %v102
    %v235 = vunpack.c.h.bf16 %v102
    %v236 = vunpack.c.l.bf16 %v103
    %v237 = vunpack.c.h.bf16 %v103
    %v238 = vunpack.c.l.bf16 %v104
    %v239 = vunpack.c.h.bf16 %v104
    %v240 = vunpack.c.l.bf16 %v105
    %v241 = vunpack.c.h.bf16 %v105
    %v242 = vunpack.c.l.bf16 %v106
    %v243 = vunpack.c.h.bf16 %v106
    %v244 = vunpack.c.l.bf16 %v107
    %v245 = vunpack.c.h.bf16 %v107
    %v246 = vunpack.c.l.bf16 %v108
    %v247 = vunpack.c.h.bf16 %v108
    %v248 = vunpack.c.l.bf16 %v109
    %v249 = vunpack.c.h.bf16 %v109
    %v250 = vunpack.c.l.bf16 %v110
    %v251 = vunpack.c.h.bf16 %v110
    %v252 = vunpack.c.l.bf16 %v111
    %v253 = vunpack.c.h.bf16 %v111
    %v254 = vunpack.c.l.bf16 %v112
    %v255 = vunpack.c.h.bf16 %v112
    %v256 = vunpack.c.l.bf16 %v113
    %v257 = vunpack.c.h.bf16 %v113
    %v258 = vadd.f32 %v114, %v118
    %v259 = vrot.slane %v258, 4
    %v260 = vadd.f32 %v258, %v259
    %v261 = vrot.slane %v260, 2
    %v262 = vadd.f32 %v260, %v261
    %v263 = vrot.slane %v262, 1
    %v264 = vadd.f32 %v262, %v263
    %v265 = vadd.f32 %v115, %v119
    %v266 = vrot.slane %v265, 4
    %v267 = vadd.f32 %v265, %v266
    %v268 = vrot.slane %v267, 2
    %v269 = vadd.f32 %v267, %v268
    %v270 = vrot.slane %v269, 1
    %v271 = vadd.f32 %v269, %v270
    %v272 = vadd.f32 %v116, %v120
    %v273 = vrot.slane %v272, 4
    %v274 = vadd.f32 %v272, %v273
    %v275 = vrot.slane %v274, 2
    %v276 = vadd.f32 %v274, %v275
    %v277 = vrot.slane %v276, 1
    %v278 = vadd.f32 %v276, %v277
    %v279 = vadd.f32 %v117, %v121
    %v280 = vrot.slane %v279, 4
    %v281 = vadd.f32 %v279, %v280
    %v282 = vrot.slane %v281, 2
    %v283 = vadd.f32 %v281, %v282
    %v284 = vrot.slane %v283, 1
    %v285 = vadd.f32 %v283, %v284
    %v286 = vadd.f32 %v122, %v126
    %v287 = vrot.slane %v286, 4
    %v288 = vadd.f32 %v286, %v287
    %v289 = vrot.slane %v288, 2
    %v290 = vadd.f32 %v288, %v289
    %v291 = vrot.slane %v290, 1
    %v292 = vadd.f32 %v290, %v291
    %v293 = vadd.f32 %v123, %v127
    %v294 = vrot.slane %v293, 4
    %v295 = vadd.f32 %v293, %v294
    %v296 = vrot.slane %v295, 2
    %v297 = vadd.f32 %v295, %v296
    %v298 = vrot.slane %v297, 1
    %v299 = vadd.f32 %v297, %v298
    %v300 = vadd.f32 %v124, %v128
    %v301 = vrot.slane %v300, 4
    %v302 = vadd.f32 %v300, %v301
    %v303 = vrot.slane %v302, 2
    %v304 = vadd.f32 %v302, %v303
    %v305 = vrot.slane %v304, 1
    %v306 = vadd.f32 %v304, %v305
    %v307 = vadd.f32 %v125, %v129
    %v308 = vrot.slane %v307, 4
    %v309 = vadd.f32 %v307, %v308
    %v310 = vrot.slane %v309, 2
    %v311 = vadd.f32 %v309, %v310
    %v312 = vrot.slane %v311, 1
    %v313 = vadd.f32 %v311, %v312
    %v314 = vadd.f32 %v130, %v134
    %v315 = vrot.slane %v314, 4
    %v316 = vadd.f32 %v314, %v315
    %v317 = vrot.slane %v316, 2
    %v318 = vadd.f32 %v316, %v317
    %v319 = vrot.slane %v318, 1
    %v320 = vadd.f32 %v318, %v319
    %v321 = vadd.f32 %v131, %v135
    %v322 = vrot.slane %v321, 4
    %v323 = vadd.f32 %v321, %v322
    %v324 = vrot.slane %v323, 2
    %v325 = vadd.f32 %v323, %v324
    %v326 = vrot.slane %v325, 1
    %v327 = vadd.f32 %v325, %v326
    %v328 = vadd.f32 %v132, %v136
    %v329 = vrot.slane %v328, 4
    %v330 = vadd.f32 %v328, %v329
    %v331 = vrot.slane %v330, 2
    %v332 = vadd.f32 %v330, %v331
    %v333 = vrot.slane %v332, 1
    %v334 = vadd.f32 %v332, %v333
    %v335 = vadd.f32 %v133, %v137
    %v336 = vrot.slane %v335, 4
    %v337 = vadd.f32 %v335, %v336
    %v338 = vrot.slane %v337, 2
    %v339 = vadd.f32 %v337, %v338
    %v340 = vrot.slane %v339, 1
    %v341 = vadd.f32 %v339, %v340
    %v342 = vadd.f32 %v138, %v142
    %v343 = vrot.slane %v342, 4
    %v344 = vadd.f32 %v342, %v343
    %v345 = vrot.slane %v344, 2
    %v346 = vadd.f32 %v344, %v345
    %v347 = vrot.slane %v346, 1
    %v348 = vadd.f32 %v346, %v347
    %v349 = vadd.f32 %v139, %v143
    %v350 = vrot.slane %v349, 4
    %v351 = vadd.f32 %v349, %v350
    %v352 = vrot.slane %v351, 2
    %v353 = vadd.f32 %v351, %v352
    %v354 = vrot.slane %v353, 1
    %v355 = vadd.f32 %v353, %v354
    %v356 = vadd.f32 %v140, %v144
    %v357 = vrot.slane %v356, 4
    %v358 = vadd.f32 %v356, %v357
    %v359 = vrot.slane %v358, 2
    %v360 = vadd.f32 %v358, %v359
    %v361 = vrot.slane %v360, 1
    %v362 = vadd.f32 %v360, %v361
    %v363 = vadd.f32 %v141, %v145
    %v364 = vrot.slane %v363, 4
    %v365 = vadd.f32 %v363, %v364
    %v366 = vrot.slane %v365, 2
    %v367 = vadd.f32 %v365, %v366
    %v368 = vrot.slane %v367, 1
    %v369 = vadd.f32 %v367, %v368
    %v370 = vadd.f32 %v146, %v150
    %v371 = vrot.slane %v370, 4
    %v372 = vadd.f32 %v370, %v371
    %v373 = vrot.slane %v372, 2
    %v374 = vadd.f32 %v372, %v373
    %v375 = vrot.slane %v374, 1
    %v376 = vadd.f32 %v374, %v375
    %v377 = vadd.f32 %v147, %v151
    %v378 = vrot.slane %v377, 4
    %v379 = vadd.f32 %v377, %v378
    %v380 = vrot.slane %v379, 2
    %v381 = vadd.f32 %v379, %v380
    %v382 = vrot.slane %v381, 1
    %v383 = vadd.f32 %v381, %v382
    %v384 = vadd.f32 %v148, %v152
    %v385 = vrot.slane %v384, 4
    %v386 = vadd.f32 %v384, %v385
    %v387 = vrot.slane %v386, 2
    %v388 = vadd.f32 %v386, %v387
    %v389 = vrot.slane %v388, 1
    %v390 = vadd.f32 %v388, %v389
    %v391 = vadd.f32 %v149, %v153
    %v392 = vrot.slane %v391, 4
    %v393 = vadd.f32 %v391, %v392
    %v394 = vrot.slane %v393, 2
    %v395 = vadd.f32 %v393, %v394
    %v396 = vrot.slane %v395, 1
    %v397 = vadd.f32 %v395, %v396
    %v398 = vadd.f32 %v154, %v158
    %v399 = vrot.slane %v398, 4
    %v400 = vadd.f32 %v398, %v399
    %v401 = vrot.slane %v400, 2
    %v402 = vadd.f32 %v400, %v401
    %v403 = vrot.slane %v402, 1
    %v404 = vadd.f32 %v402, %v403
    %v405 = vadd.f32 %v155, %v159
    %v406 = vrot.slane %v405, 4
    %v407 = vadd.f32 %v405, %v406
    %v408 = vrot.slane %v407, 2
    %v409 = vadd.f32 %v407, %v408
    %v410 = vrot.slane %v409, 1
    %v411 = vadd.f32 %v409, %v410
    %v412 = vadd.f32 %v156, %v160
    %v413 = vrot.slane %v412, 4
    %v414 = vadd.f32 %v412, %v413
    %v415 = vrot.slane %v414, 2
    %v416 = vadd.f32 %v414, %v415
    %v417 = vrot.slane %v416, 1
    %v418 = vadd.f32 %v416, %v417
    %v419 = vadd.f32 %v157, %v161
    %v420 = vrot.slane %v419, 4
    %v421 = vadd.f32 %v419, %v420
    %v422 = vrot.slane %v421, 2
    %v423 = vadd.f32 %v421, %v422
    %v424 = vrot.slane %v423, 1
    %v425 = vadd.f32 %v423, %v424
    %v426 = vadd.f32 %v162, %v166
    %v427 = vrot.slane %v426, 4
    %v428 = vadd.f32 %v426, %v427
    %v429 = vrot.slane %v428, 2
    %v430 = vadd.f32 %v428, %v429
    %v431 = vrot.slane %v430, 1
    %v432 = vadd.f32 %v430, %v431
    %v433 = vadd.f32 %v163, %v167
    %v434 = vrot.slane %v433, 4
    %v435 = vadd.f32 %v433, %v434
    %v436 = vrot.slane %v435, 2
    %v437 = vadd.f32 %v435, %v436
    %v438 = vrot.slane %v437, 1
    %v439 = vadd.f32 %v437, %v438
    %v440 = vadd.f32 %v164, %v168
    %v441 = vrot.slane %v440, 4
    %v442 = vadd.f32 %v440, %v441
    %v443 = vrot.slane %v442, 2
    %v444 = vadd.f32 %v442, %v443
    %v445 = vrot.slane %v444, 1
    %v446 = vadd.f32 %v444, %v445
    %v447 = vadd.f32 %v165, %v169
    %v448 = vrot.slane %v447, 4
    %v449 = vadd.f32 %v447, %v448
    %v450 = vrot.slane %v449, 2
    %v451 = vadd.f32 %v449, %v450
    %v452 = vrot.slane %v451, 1
    %v453 = vadd.f32 %v451, %v452
    %v454 = vadd.f32 %v170, %v174
    %v455 = vrot.slane %v454, 4
    %v456 = vadd.f32 %v454, %v455
    %v457 = vrot.slane %v456, 2
    %v458 = vadd.f32 %v456, %v457
    %v459 = vrot.slane %v458, 1
    %v460 = vadd.f32 %v458, %v459
    %v461 = vadd.f32 %v171, %v175
    %v462 = vrot.slane %v461, 4
    %v463 = vadd.f32 %v461, %v462
    %v464 = vrot.slane %v463, 2
    %v465 = vadd.f32 %v463, %v464
    %v466 = vrot.slane %v465, 1
    %v467 = vadd.f32 %v465, %v466
    %v468 = vadd.f32 %v172, %v176
    %v469 = vrot.slane %v468, 4
    %v470 = vadd.f32 %v468, %v469
    %v471 = vrot.slane %v470, 2
    %v472 = vadd.f32 %v470, %v471
    %v473 = vrot.slane %v472, 1
    %v474 = vadd.f32 %v472, %v473
    %v475 = vadd.f32 %v173, %v177
    %v476 = vrot.slane %v475, 4
    %v477 = vadd.f32 %v475, %v476
    %v478 = vrot.slane %v477, 2
    %v479 = vadd.f32 %v477, %v478
    %v480 = vrot.slane %v479, 1
    %v481 = vadd.f32 %v479, %v480
    %v482 = vadd.f32 %v178, %v182
    %v483 = vrot.slane %v482, 4
    %v484 = vadd.f32 %v482, %v483
    %v485 = vrot.slane %v484, 2
    %v486 = vadd.f32 %v484, %v485
    %v487 = vrot.slane %v486, 1
    %v488 = vadd.f32 %v486, %v487
    %v489 = vadd.f32 %v179, %v183
    %v490 = vrot.slane %v489, 4
    %v491 = vadd.f32 %v489, %v490
    %v492 = vrot.slane %v491, 2
    %v493 = vadd.f32 %v491, %v492
    %v494 = vrot.slane %v493, 1
    %v495 = vadd.f32 %v493, %v494
    %v496 = vadd.f32 %v180, %v184
    %v497 = vrot.slane %v496, 4
    %v498 = vadd.f32 %v496, %v497
    %v499 = vrot.slane %v498, 2
    %v500 = vadd.f32 %v498, %v499
    %v501 = vrot.slane %v500, 1
    %v502 = vadd.f32 %v500, %v501
    %v503 = vadd.f32 %v181, %v185
    %v504 = vrot.slane %v503, 4
    %v505 = vadd.f32 %v503, %v504
    %v506 = vrot.slane %v505, 2
    %v507 = vadd.f32 %v505, %v506
    %v508 = vrot.slane %v507, 1
    %v509 = vadd.f32 %v507, %v508
    %v510 = vadd.f32 %v186, %v190
    %v511 = vrot.slane %v510, 4
    %v512 = vadd.f32 %v510, %v511
    %v513 = vrot.slane %v512, 2
    %v514 = vadd.f32 %v512, %v513
    %v515 = vrot.slane %v514, 1
    %v516 = vadd.f32 %v514, %v515
    %v517 = vadd.f32 %v187, %v191
    %v518 = vrot.slane %v517, 4
    %v519 = vadd.f32 %v517, %v518
    %v520 = vrot.slane %v519, 2
    %v521 = vadd.f32 %v519, %v520
    %v522 = vrot.slane %v521, 1
    %v523 = vadd.f32 %v521, %v522
    %v524 = vadd.f32 %v188, %v192
    %v525 = vrot.slane %v524, 4
    %v526 = vadd.f32 %v524, %v525
    %v527 = vrot.slane %v526, 2
    %v528 = vadd.f32 %v526, %v527
    %v529 = vrot.slane %v528, 1
    %v530 = vadd.f32 %v528, %v529
    %v531 = vadd.f32 %v189, %v193
    %v532 = vrot.slane %v531, 4
    %v533 = vadd.f32 %v531, %v532
    %v534 = vrot.slane %v533, 2
    %v535 = vadd.f32 %v533, %v534
    %v536 = vrot.slane %v535, 1
    %v537 = vadd.f32 %v535, %v536
    %v538 = vadd.f32 %v194, %v198
    %v539 = vrot.slane %v538, 4
    %v540 = vadd.f32 %v538, %v539
    %v541 = vrot.slane %v540, 2
    %v542 = vadd.f32 %v540, %v541
    %v543 = vrot.slane %v542, 1
    %v544 = vadd.f32 %v542, %v543
    %v545 = vadd.f32 %v195, %v199
    %v546 = vrot.slane %v545, 4
    %v547 = vadd.f32 %v545, %v546
    %v548 = vrot.slane %v547, 2
    %v549 = vadd.f32 %v547, %v548
    %v550 = vrot.slane %v549, 1
    %v551 = vadd.f32 %v549, %v550
    %v552 = vadd.f32 %v196, %v200
    %v553 = vrot.slane %v552, 4
    %v554 = vadd.f32 %v552, %v553
    %v555 = vrot.slane %v554, 2
    %v556 = vadd.f32 %v554, %v555
    %v557 = vrot.slane %v556, 1
    %v558 = vadd.f32 %v556, %v557
    %v559 = vadd.f32 %v197, %v201
    %v560 = vrot.slane %v559, 4
    %v561 = vadd.f32 %v559, %v560
    %v562 = vrot.slane %v561, 2
    %v563 = vadd.f32 %v561, %v562
    %v564 = vrot.slane %v563, 1
    %v565 = vadd.f32 %v563, %v564
    %v566 = vadd.f32 %v202, %v206
    %v567 = vrot.slane %v566, 4
    %v568 = vadd.f32 %v566, %v567
    %v569 = vrot.slane %v568, 2
    %v570 = vadd.f32 %v568, %v569
    %v571 = vrot.slane %v570, 1
    %v572 = vadd.f32 %v570, %v571
    %v573 = vadd.f32 %v203, %v207
    %v574 = vrot.slane %v573, 4
    %v575 = vadd.f32 %v573, %v574
    %v576 = vrot.slane %v575, 2
    %v577 = vadd.f32 %v575, %v576
    %v578 = vrot.slane %v577, 1
    %v579 = vadd.f32 %v577, %v578
    %v580 = vadd.f32 %v204, %v208
    %v581 = vrot.slane %v580, 4
    %v582 = vadd.f32 %v580, %v581
    %v583 = vrot.slane %v582, 2
    %v584 = vadd.f32 %v582, %v583
    %v585 = vrot.slane %v584, 1
    %v586 = vadd.f32 %v584, %v585
    %v587 = vadd.f32 %v205, %v209
    %v588 = vrot.slane %v587, 4
    %v589 = vadd.f32 %v587, %v588
    %v590 = vrot.slane %v589, 2
    %v591 = vadd.f32 %v589, %v590
    %v592 = vrot.slane %v591, 1
    %v593 = vadd.f32 %v591, %v592
    %v594 = vadd.f32 %v210, %v214
    %v595 = vrot.slane %v594, 4
    %v596 = vadd.f32 %v594, %v595
    %v597 = vrot.slane %v596, 2
    %v598 = vadd.f32 %v596, %v597
    %v599 = vrot.slane %v598, 1
    %v600 = vadd.f32 %v598, %v599
    %v601 = vadd.f32 %v211, %v215
    %v602 = vrot.slane %v601, 4
    %v603 = vadd.f32 %v601, %v602
    %v604 = vrot.slane %v603, 2
    %v605 = vadd.f32 %v603, %v604
    %v606 = vrot.slane %v605, 1
    %v607 = vadd.f32 %v605, %v606
    %v608 = vadd.f32 %v212, %v216
    %v609 = vrot.slane %v608, 4
    %v610 = vadd.f32 %v608, %v609
    %v611 = vrot.slane %v610, 2
    %v612 = vadd.f32 %v610, %v611
    %v613 = vrot.slane %v612, 1
    %v614 = vadd.f32 %v612, %v613
    %v615 = vadd.f32 %v213, %v217
    %v616 = vrot.slane %v615, 4
    %v617 = vadd.f32 %v615, %v616
    %v618 = vrot.slane %v617, 2
    %v619 = vadd.f32 %v617, %v618
    %v620 = vrot.slane %v619, 1
    %v621 = vadd.f32 %v619, %v620
    %v622 = vadd.f32 %v218, %v222
    %v623 = vrot.slane %v622, 4
    %v624 = vadd.f32 %v622, %v623
    %v625 = vrot.slane %v624, 2
    %v626 = vadd.f32 %v624, %v625
    %v627 = vrot.slane %v626, 1
    %v628 = vadd.f32 %v626, %v627
    %v629 = vadd.f32 %v219, %v223
    %v630 = vrot.slane %v629, 4
    %v631 = vadd.f32 %v629, %v630
    %v632 = vrot.slane %v631, 2
    %v633 = vadd.f32 %v631, %v632
    %v634 = vrot.slane %v633, 1
    %v635 = vadd.f32 %v633, %v634
    %v636 = vadd.f32 %v220, %v224
    %v637 = vrot.slane %v636, 4
    %v638 = vadd.f32 %v636, %v637
    %v639 = vrot.slane %v638, 2
    %v640 = vadd.f32 %v638, %v639
    %v641 = vrot.slane %v640, 1
    %v642 = vadd.f32 %v640, %v641
    %v643 = vadd.f32 %v221, %v225
    %v644 = vrot.slane %v643, 4
    %v645 = vadd.f32 %v643, %v644
    %v646 = vrot.slane %v645, 2
    %v647 = vadd.f32 %v645, %v646
    %v648 = vrot.slane %v647, 1
    %v649 = vadd.f32 %v647, %v648
    %v650 = vadd.f32 %v226, %v230
    %v651 = vrot.slane %v650, 4
    %v652 = vadd.f32 %v650, %v651
    %v653 = vrot.slane %v652, 2
    %v654 = vadd.f32 %v652, %v653
    %v655 = vrot.slane %v654, 1
    %v656 = vadd.f32 %v654, %v655
    %v657 = vadd.f32 %v227, %v231
    %v658 = vrot.slane %v657, 4
    %v659 = vadd.f32 %v657, %v658
    %v660 = vrot.slane %v659, 2
    %v661 = vadd.f32 %v659, %v660
    %v662 = vrot.slane %v661, 1
    %v663 = vadd.f32 %v661, %v662
    %v664 = vadd.f32 %v228, %v232
    %v665 = vrot.slane %v664, 4
    %v666 = vadd.f32 %v664, %v665
    %v667 = vrot.slane %v666, 2
    %v668 = vadd.f32 %v666, %v667
    %v669 = vrot.slane %v668, 1
    %v670 = vadd.f32 %v668, %v669
    %v671 = vadd.f32 %v229, %v233
    %v672 = vrot.slane %v671, 4
    %v673 = vadd.f32 %v671, %v672
    %v674 = vrot.slane %v673, 2
    %v675 = vadd.f32 %v673, %v674
    %v676 = vrot.slane %v675, 1
    %v677 = vadd.f32 %v675, %v676
    %v678 = vadd.f32 %v234, %v238
    %v679 = vrot.slane %v678, 4
    %v680 = vadd.f32 %v678, %v679
    %v681 = vrot.slane %v680, 2
    %v682 = vadd.f32 %v680, %v681
    %v683 = vrot.slane %v682, 1
    %v684 = vadd.f32 %v682, %v683
    %v685 = vadd.f32 %v235, %v239
    %v686 = vrot.slane %v685, 4
    %v687 = vadd.f32 %v685, %v686
    %v688 = vrot.slane %v687, 2
    %v689 = vadd.f32 %v687, %v688
    %v690 = vrot.slane %v689, 1
    %v691 = vadd.f32 %v689, %v690
    %v692 = vadd.f32 %v236, %v240
    %v693 = vrot.slane %v692, 4
    %v694 = vadd.f32 %v692, %v693
    %v695 = vrot.slane %v694, 2
    %v696 = vadd.f32 %v694, %v695
    %v697 = vrot.slane %v696, 1
    %v698 = vadd.f32 %v696, %v697
    %v699 = vadd.f32 %v237, %v241
    %v700 = vrot.slane %v699, 4
    %v701 = vadd.f32 %v699, %v700
    %v702 = vrot.slane %v701, 2
    %v703 = vadd.f32 %v701, %v702
    %v704 = vrot.slane %v703, 1
    %v705 = vadd.f32 %v703, %v704
    %v706 = vadd.f32 %v242, %v246
    %v707 = vrot.slane %v706, 4
    %v708 = vadd.f32 %v706, %v707
    %v709 = vrot.slane %v708, 2
    %v710 = vadd.f32 %v708, %v709
    %v711 = vrot.slane %v710, 1
    %v712 = vadd.f32 %v710, %v711
    %v713 = vadd.f32 %v243, %v247
    %v714 = vrot.slane %v713, 4
    %v715 = vadd.f32 %v713, %v714
    %v716 = vrot.slane %v715, 2
    %v717 = vadd.f32 %v715, %v716
    %v718 = vrot.slane %v717, 1
    %v719 = vadd.f32 %v717, %v718
    %v720 = vadd.f32 %v244, %v248
    %v721 = vrot.slane %v720, 4
    %v722 = vadd.f32 %v720, %v721
    %v723 = vrot.slane %v722, 2
    %v724 = vadd.f32 %v722, %v723
    %v725 = vrot.slane %v724, 1
    %v726 = vadd.f32 %v724, %v725
    %v727 = vadd.f32 %v245, %v249
    %v728 = vrot.slane %v727, 4
    %v729 = vadd.f32 %v727, %v728
    %v730 = vrot.slane %v729, 2
    %v731 = vadd.f32 %v729, %v730
    %v732 = vrot.slane %v731, 1
    %v733 = vadd.f32 %v731, %v732
    %v734 = vadd.f32 %v250, %v254
    %v735 = vrot.slane %v734, 4
    %v736 = vadd.f32 %v734, %v735
    %v737 = vrot.slane %v736, 2
    %v738 = vadd.f32 %v736, %v737
    %v739 = vrot.slane %v738, 1
    %v740 = vadd.f32 %v738, %v739
    %v741 = vadd.f32 %v251, %v255
    %v742 = vrot.slane %v741, 4
    %v743 = vadd.f32 %v741, %v742
    %v744 = vrot.slane %v743, 2
    %v745 = vadd.f32 %v743, %v744
    %v746 = vrot.slane %v745, 1
    %v747 = vadd.f32 %v745, %v746
    %v748 = vadd.f32 %v252, %v256
    %v749 = vrot.slane %v748, 4
    %v750 = vadd.f32 %v748, %v749
    %v751 = vrot.slane %v750, 2
    %v752 = vadd.f32 %v750, %v751
    %v753 = vrot.slane %v752, 1
    %v754 = vadd.f32 %v752, %v753
    %v755 = vadd.f32 %v253, %v257
    %v756 = vrot.slane %v755, 4
    %v757 = vadd.f32 %v755, %v756
    %v758 = vrot.slane %v757, 2
    %v759 = vadd.f32 %v757, %v758
    %v760 = vrot.slane %v759, 1
    %v761 = vadd.f32 %v759, %v760
    %v762 = vpack.c.bf16 %v264, %v264
    %v763 = vpack.c.bf16 %v271, %v271
    %v764 = vpack.c.bf16 %v278, %v278
    %v765 = vpack.c.bf16 %v285, %v285
    %v766 = vpack.c.bf16 %v292, %v292
    %v767 = vpack.c.bf16 %v299, %v299
    %v768 = vpack.c.bf16 %v306, %v306
    %v769 = vpack.c.bf16 %v313, %v313
    %v770 = vpack.c.bf16 %v320, %v320
    %v771 = vpack.c.bf16 %v327, %v327
    %v772 = vpack.c.bf16 %v334, %v334
    %v773 = vpack.c.bf16 %v341, %v341
    %v774 = vpack.c.bf16 %v348, %v348
    %v775 = vpack.c.bf16 %v355, %v355
    %v776 = vpack.c.bf16 %v362, %v362
    %v777 = vpack.c.bf16 %v369, %v369
    %v778 = vpack.c.bf16 %v376, %v376
    %v779 = vpack.c.bf16 %v383, %v383
    %v780 = vpack.c.bf16 %v390, %v390
    %v781 = vpack.c.bf16 %v397, %v397
    %v782 = vpack.c.bf16 %v404, %v404
    %v783 = vpack.c.bf16 %v411, %v411
    %v784 = vpack.c.bf16 %v418, %v418
    %v785 = vpack.c.bf16 %v425, %v425
    %v786 = vpack.c.bf16 %v432, %v432
    %v787 = vpack.c.bf16 %v439, %v439
    %v788 = vpack.c.bf16 %v446, %v446
    %v789 = vpack.c.bf16 %v453, %v453
    %v790 = vpack.c.bf16 %v460, %v460
    %v791 = vpack.c.bf16 %v467, %v467
    %v792 = vpack.c.bf16 %v474, %v474
    %v793 = vpack.c.bf16 %v481, %v481
    %v794 = vpack.c.bf16 %v488, %v488
    %v795 = vpack.c.bf16 %v495, %v495
    %v796 = vpack.c.bf16 %v502, %v502
    %v797 = vpack.c.bf16 %v509, %v509
    %v798 = vpack.c.bf16 %v516, %v516
    %v799 = vpack.c.bf16 %v523, %v523
    %v800 = vpack.c.bf16 %v530, %v530
    %v801 = vpack.c.bf16 %v537, %v537
    %v802 = vpack.c.bf16 %v544, %v544
    %v803 = vpack.c.bf16 %v551, %v551
    %v804 = vpack.c.bf16 %v558, %v558
    %v805 = vpack.c.bf16 %v565, %v565
    %v806 = vpack.c.bf16 %v572, %v572
    %v807 = vpack.c.bf16 %v579, %v579
    %v808 = vpack.c.bf16 %v586, %v586
    %v809 = vpack.c.bf16 %v593, %v593
    %v810 = vpack.c.bf16 %v600, %v600
    %v811 = vpack.c.bf16 %v607, %v607
    %v812 = vpack.c.bf16 %v614, %v614
    %v813 = vpack.c.bf16 %v621, %v621
    %v814 = vpack.c.bf16 %v628, %v628
    %v815 = vpack.c.bf16 %v635, %v635
    %v816 = vpack.c.bf16 %v642, %v642
    %v817 = vpack.c.bf16 %v649, %v649
    %v818 = vpack.c.bf16 %v656, %v656
    %v819 = vpack.c.bf16 %v663, %v663
    %v820 = vpack.c.bf16 %v670, %v670
    %v821 = vpack.c.bf16 %v677, %v677
    %v822 = vpack.c.bf16 %v684, %v684
    %v823 = vpack.c.bf16 %v691, %v691
    %v824 = vpack.c.bf16 %v698, %v698
    %v825 = vpack.c.bf16 %v705, %v705
    %v826 = vpack.c.bf16 %v712, %v712
    %v827 = vpack.c.bf16 %v719, %v719
    %v828 = vpack.c.bf16 %v726, %v726
    %v829 = vpack.c.bf16 %v733, %v733
    %v830 = vpack.c.bf16 %v740, %v740
    %v831 = vpack.c.bf16 %v747, %v747
    %v832 = vpack.c.bf16 %v754, %v754
    %v833 = vpack.c.bf16 %v761, %v761
    %v842 = vunpack.c.l.b16 %v762
    %v843 = vunpack.c.l.b16 %v763
    %v844 = vunpack.c.l.b16 %v764
    %v845 = vunpack.c.l.b16 %v765
    %v846 = vunpack.c.l.b16 %v766
    %v847 = vunpack.c.l.b16 %v767
    %v848 = vunpack.c.l.b16 %v768
    %v849 = vunpack.c.l.b16 %v769
    %vm850 = vcmask 1041409
    %v851 = vsel %vm850, %v846, %v842
    %v852 = vsel %vm850, %v847, %v843
    %v853 = vsel %vm850, %v848, %v844
    %v854 = vsel %vm850, %v849, %v845
    %v855 = vpack.c.b16 %v851, %v851
    %v856 = vpack.c.b16 %v852, %v852
    %v857 = vpack.c.b16 %v853, %v853
    %v858 = vpack.c.b16 %v854, %v854
    %v867 = vunpack.c.l.b16 %v770
    %v868 = vunpack.c.l.b16 %v771
    %v869 = vunpack.c.l.b16 %v772
    %v870 = vunpack.c.l.b16 %v773
    %v871 = vunpack.c.l.b16 %v774
    %v872 = vunpack.c.l.b16 %v775
    %v873 = vunpack.c.l.b16 %v776
    %v874 = vunpack.c.l.b16 %v777
    %v875 = vsel %vm850, %v871, %v867
    %v876 = vsel %vm850, %v872, %v868
    %v877 = vsel %vm850, %v873, %v869
    %v878 = vsel %vm850, %v874, %v870
    %v879 = vpack.c.b16 %v875, %v875
    %v880 = vpack.c.b16 %v876, %v876
    %v881 = vpack.c.b16 %v877, %v877
    %v882 = vpack.c.b16 %v878, %v878
    %v891 = vunpack.c.l.b16 %v786
    %v892 = vunpack.c.l.b16 %v787
    %v893 = vunpack.c.l.b16 %v788
    %v894 = vunpack.c.l.b16 %v789
    %v895 = vunpack.c.l.b16 %v790
    %v896 = vunpack.c.l.b16 %v791
    %v897 = vunpack.c.l.b16 %v792
    %v898 = vunpack.c.l.b16 %v793
    %v899 = vsel %vm850, %v895, %v891
    %v900 = vsel %vm850, %v896, %v892
    %v901 = vsel %vm850, %v897, %v893
    %v902 = vsel %vm850, %v898, %v894
    %v903 = vpack.c.b16 %v899, %v899
    %v904 = vpack.c.b16 %v900, %v900
    %v905 = vpack.c.b16 %v901, %v901
    %v906 = vpack.c.b16 %v902, %v902
    %v915 = vunpack.c.l.b16 %v794
    %v916 = vunpack.c.l.b16 %v795
    %v917 = vunpack.c.l.b16 %v796
    %v918 = vunpack.c.l.b16 %v797
    %v919 = vunpack.c.l.b16 %v798
    %v920 = vunpack.c.l.b16 %v799
    %v921 = vunpack.c.l.b16 %v800
    %v922 = vunpack.c.l.b16 %v801
    %v923 = vsel %vm850, %v919, %v915
    %v924 = vsel %vm850, %v920, %v916
    %v925 = vsel %vm850, %v921, %v917
    %v926 = vsel %vm850, %v922, %v918
    %v927 = vpack.c.b16 %v923, %v923
    %v928 = vpack.c.b16 %v924, %v924
    %v929 = vpack.c.b16 %v925, %v925
    %v930 = vpack.c.b16 %v926, %v926
    %v939 = vunpack.c.l.b16 %v778
    %v940 = vunpack.c.l.b16 %v779
    %v941 = vunpack.c.l.b16 %v780
    %v942 = vunpack.c.l.b16 %v781
    %v943 = vunpack.c.l.b16 %v782
    %v944 = vunpack.c.l.b16 %v783
    %v945 = vunpack.c.l.b16 %v784
    %v946 = vunpack.c.l.b16 %v785
    %v947 = vsel %vm850, %v943, %v939
    %v948 = vsel %vm850, %v944, %v940
    %v949 = vsel %vm850, %v945, %v941
    %v950 = vsel %vm850, %v946, %v942
    %v951 = vpack.c.b16 %v947, %v947
    %v952 = vpack.c.b16 %v948, %v948
    %v953 = vpack.c.b16 %v949, %v949
    %v954 = vpack.c.b16 %v950, %v950
    %v963 = vunpack.c.l.b16 %v802
    %v964 = vunpack.c.l.b16 %v803
    %v965 = vunpack.c.l.b16 %v804
    %v966 = vunpack.c.l.b16 %v805
    %v967 = vunpack.c.l.b16 %v806
    %v968 = vunpack.c.l.b16 %v807
    %v969 = vunpack.c.l.b16 %v808
    %v970 = vunpack.c.l.b16 %v809
    %v971 = vsel %vm850, %v967, %v963
    %v972 = vsel %vm850, %v968, %v964
    %v973 = vsel %vm850, %v969, %v965
    %v974 = vsel %vm850, %v970, %v966
    %v975 = vpack.c.b16 %v971, %v971
    %v976 = vpack.c.b16 %v972, %v972
    %v977 = vpack.c.b16 %v973, %v973
    %v978 = vpack.c.b16 %v974, %v974
    %v987 = vunpack.c.l.b16 %v810
    %v988 = vunpack.c.l.b16 %v811
    %v989 = vunpack.c.l.b16 %v812
    %v990 = vunpack.c.l.b16 %v813
    %v991 = vunpack.c.l.b16 %v814
    %v992 = vunpack.c.l.b16 %v815
    %v993 = vunpack.c.l.b16 %v816
    %v994 = vunpack.c.l.b16 %v817
    %v995 = vsel %vm850, %v991, %v987
    %v996 = vsel %vm850, %v992, %v988
    %v997 = vsel %vm850, %v993, %v989
    %v998 = vsel %vm850, %v994, %v990
    %v999 = vpack.c.b16 %v995, %v995
    %v1000 = vpack.c.b16 %v996, %v996
    %v1001 = vpack.c.b16 %v997, %v997
    %v1002 = vpack.c.b16 %v998, %v998
    %v1011 = vunpack.c.l.b16 %v818
    %v1012 = vunpack.c.l.b16 %v819
    %v1013 = vunpack.c.l.b16 %v820
    %v1014 = vunpack.c.l.b16 %v821
    %v1015 = vunpack.c.l.b16 %v822
    %v1016 = vunpack.c.l.b16 %v823
    %v1017 = vunpack.c.l.b16 %v824
    %v1018 = vunpack.c.l.b16 %v825
    %v1019 = vsel %vm850, %v1015, %v1011
    %v1020 = vsel %vm850, %v1016, %v1012
    %v1021 = vsel %vm850, %v1017, %v1013
    %v1022 = vsel %vm850, %v1018, %v1014
    %v1023 = vpack.c.b16 %v1019, %v1019
    %v1024 = vpack.c.b16 %v1020, %v1020
    %v1025 = vpack.c.b16 %v1021, %v1021
    %v1026 = vpack.c.b16 %v1022, %v1022
    %v1035 = vunpack.c.l.b16 %v826
    %v1036 = vunpack.c.l.b16 %v827
    %v1037 = vunpack.c.l.b16 %v828
    %v1038 = vunpack.c.l.b16 %v829
    %v1039 = vunpack.c.l.b16 %v830
    %v1040 = vunpack.c.l.b16 %v831
    %v1041 = vunpack.c.l.b16 %v832
    %v1042 = vunpack.c.l.b16 %v833
    %v1043 = vsel %vm850, %v1039, %v1035
    %v1044 = vsel %vm850, %v1040, %v1036
    %v1045 = vsel %vm850, %v1041, %v1037
    %v1046 = vsel %vm850, %v1042, %v1038
    %v1047 = vpack.c.b16 %v1043, %v1043
    %v1048 = vpack.c.b16 %v1044, %v1044
    %v1049 = vpack.c.b16 %v1045, %v1045
    %v1050 = vpack.c.b16 %v1046, %v1046
    %v1051 = vrot.slane %v879, 7
    %v1052 = vrot.slane %v880, 7
    %v1053 = vrot.slane %v881, 7
    %v1054 = vrot.slane %v882, 7
    %v1055 = vrot.slane %v951, 7
    %v1056 = vrot.slane %v952, 7
    %v1057 = vrot.slane %v953, 7
    %v1058 = vrot.slane %v954, 7
    %v1059 = vrot.slane %v927, 7
    %v1060 = vrot.slane %v928, 7
    %v1061 = vrot.slane %v929, 7
    %v1062 = vrot.slane %v930, 7
    %v1063 = vrot.slane %v975, 7
    %v1064 = vrot.slane %v976, 7
    %v1065 = vrot.slane %v977, 7
    %v1066 = vrot.slane %v978, 7
    %v1067 = vrot.slane %v903, 6
    %v1068 = vrot.slane %v904, 6
    %v1069 = vrot.slane %v905, 6
    %v1070 = vrot.slane %v906, 6
    %v1071 = vrot.slane %v927, 6
    %v1072 = vrot.slane %v928, 6
    %v1073 = vrot.slane %v929, 6
    %v1074 = vrot.slane %v930, 6
    %v1075 = vrot.slane %v999, 6
    %v1076 = vrot.slane %v1000, 6
    %v1077 = vrot.slane %v1001, 6
    %v1078 = vrot.slane %v1002, 6
    %v1079 = vrot.slane %v1023, 6
    %v1080 = vrot.slane %v1024, 6
    %v1081 = vrot.slane %v1025, 6
    %v1082 = vrot.slane %v1026, 6
    %v1083 = vrot.slane %v927, 5
    %v1084 = vrot.slane %v928, 5
    %v1085 = vrot.slane %v929, 5
    %v1086 = vrot.slane %v930, 5
    %v1087 = vrot.slane %v975, 5
    %v1088 = vrot.slane %v976, 5
    %v1089 = vrot.slane %v977, 5
    %v1090 = vrot.slane %v978, 5
    %v1091 = vrot.slane %v1023, 5
    %v1092 = vrot.slane %v1024, 5
    %v1093 = vrot.slane %v1025, 5
    %v1094 = vrot.slane %v1026, 5
    %v1095 = vrot.slane %v1047, 5
    %v1096 = vrot.slane %v1048, 5
    %v1097 = vrot.slane %v1049, 5
    %v1098 = vrot.slane %v1050, 5
    %vm1099 = vcmask 1040384
    %v1102 = vsel %vm1099, %v855, %v1051
    %v1105 = vsel %vm1099, %v856, %v1052
    %v1108 = vsel %vm1099, %v857, %v1053
    %v1111 = vsel %vm1099, %v858, %v1054
    %v1114 = vsel %vm1099, %v879, %v1055
    %v1117 = vsel %vm1099, %v880, %v1056
    %v1120 = vsel %vm1099, %v881, %v1057
    %v1123 = vsel %vm1099, %v882, %v1058
    %v1126 = vsel %vm1099, %v903, %v1059
    %v1129 = vsel %vm1099, %v904, %v1060
    %v1132 = vsel %vm1099, %v905, %v1061
    %v1135 = vsel %vm1099, %v906, %v1062
    %v1138 = vsel %vm1099, %v927, %v1063
    %v1141 = vsel %vm1099, %v928, %v1064
    %v1144 = vsel %vm1099, %v929, %v1065
    %v1147 = vsel %vm1099, %v930, %v1066
    %vm1148 = vcmask 1041408
    %v1150 = vsel %vm1148, %v1102, %v1067
    %v1152 = vsel %vm1148, %v1105, %v1068
    %v1154 = vsel %vm1148, %v1108, %v1069
    %v1156 = vsel %vm1148, %v1111, %v1070
    %v1158 = vsel %vm1148, %v1114, %v1071
    %v1160 = vsel %vm1148, %v1117, %v1072
    %v1162 = vsel %vm1148, %v1120, %v1073
    %v1164 = vsel %vm1148, %v1123, %v1074
    %v1166 = vsel %vm1148, %v1126, %v1075
    %v1168 = vsel %vm1148, %v1129, %v1076
    %v1170 = vsel %vm1148, %v1132, %v1077
    %v1172 = vsel %vm1148, %v1135, %v1078
    %v1174 = vsel %vm1148, %v1138, %v1079
    %v1176 = vsel %vm1148, %v1141, %v1080
    %v1178 = vsel %vm1148, %v1144, %v1081
    %v1180 = vsel %vm1148, %v1147, %v1082
    %vm1181 = vcmask 1042432
    %v1183 = vsel %vm1181, %v1150, %v1083
    %v1186 = vsel %vm1181, %v1152, %v1084
    %v1189 = vsel %vm1181, %v1154, %v1085
    %v1192 = vsel %vm1181, %v1156, %v1086
    %v1195 = vsel %vm1181, %v1158, %v1087
    %v1198 = vsel %vm1181, %v1160, %v1088
    %v1201 = vsel %vm1181, %v1162, %v1089
    %v1204 = vsel %vm1181, %v1164, %v1090
    %v1207 = vsel %vm1181, %v1166, %v1091
    %v1210 = vsel %vm1181, %v1168, %v1092
    %v1213 = vsel %vm1181, %v1170, %v1093
    %v1216 = vsel %vm1181, %v1172, %v1094
    %v1219 = vsel %vm1181, %v1174, %v1095
    %v1222 = vsel %vm1181, %v1176, %v1096
    %v1225 = vsel %vm1181, %v1178, %v1097
    %v1228 = vsel %vm1181, %v1180, %v1098
    %v1230 = vld [vmem:[#allocation2] sm:$0xf]
    %v1231 = vld [vmem:[#allocation2 + $0x4] sm:$0xf]
    %v1232 = vld [vmem:[#allocation2 + $0x8] sm:$0xf]
    %v1233 = vld [vmem:[#allocation2 + $0xc] sm:$0xf]
    %v1234 = vld [vmem:[#allocation2 + $0x10] sm:$0xf]
    %v1235 = vld [vmem:[#allocation2 + $0x14] sm:$0xf]
    %v1236 = vld [vmem:[#allocation2 + $0x18] sm:$0xf]
    %v1237 = vld [vmem:[#allocation2 + $0x1c] sm:$0xf]
    %v1238 = vld [vmem:[#allocation2 + $0x20] sm:$0xf]
    %v1239 = vld [vmem:[#allocation2 + $0x24] sm:$0xf]
    %v1240 = vld [vmem:[#allocation2 + $0x28] sm:$0xf]
    %v1241 = vld [vmem:[#allocation2 + $0x2c] sm:$0xf]
    %v1242 = vld [vmem:[#allocation2 + $0x30] sm:$0xf]
    %v1243 = vld [vmem:[#allocation2 + $0x34] sm:$0xf]
    %v1244 = vld [vmem:[#allocation2 + $0x38] sm:$0xf]
    %v1245 = vld [vmem:[#allocation2 + $0x3c] sm:$0xf]
    %v1246 = vld [vmem:[#allocation2 + $0x40] sm:$0xf]
    %v1247 = vld [vmem:[#allocation2 + $0x44] sm:$0xf]
    %v1248 = vld [vmem:[#allocation2 + $0x48] sm:$0xf]
    %v1249 = vld [vmem:[#allocation2 + $0x4c] sm:$0xf]
    %v1250 = vld [vmem:[#allocation2 + $0x50] sm:$0xf]
    %v1251 = vld [vmem:[#allocation2 + $0x54] sm:$0xf]
    %v1252 = vld [vmem:[#allocation2 + $0x58] sm:$0xf]
    %v1253 = vld [vmem:[#allocation2 + $0x5c] sm:$0xf]
    %v1254 = vld [vmem:[#allocation2 + $0x60] sm:$0xf]
    %v1255 = vld [vmem:[#allocation2 + $0x64] sm:$0xf]
    %v1256 = vld [vmem:[#allocation2 + $0x68] sm:$0xf]
    %v1257 = vld [vmem:[#allocation2 + $0x6c] sm:$0xf]
    %v1258 = vld [vmem:[#allocation2 + $0x70] sm:$0xf]
    %v1259 = vld [vmem:[#allocation2 + $0x74] sm:$0xf]
    %v1260 = vld [vmem:[#allocation2 + $0x78] sm:$0xf]
    %v1261 = vld [vmem:[#allocation2 + $0x7c] sm:$0xf]
    %v1262 = vld [vmem:[#allocation2 + $0x80] sm:$0xf]
    %v1263 = vld [vmem:[#allocation2 + $0x84] sm:$0xf]
    %v1264 = vld [vmem:[#allocation2 + $0x88] sm:$0xf]
    %v1265 = vld [vmem:[#allocation2 + $0x8c] sm:$0xf]
    %v1266 = vld [vmem:[#allocation2 + $0x90] sm:$0xf]
    %v1267 = vld [vmem:[#allocation2 + $0x94] sm:$0xf]
    %v1268 = vld [vmem:[#allocation2 + $0x98] sm:$0xf]
    %v1269 = vld [vmem:[#allocation2 + $0x9c] sm:$0xf]
    %v1270 = vld [vmem:[#allocation2 + $0xa0] sm:$0xf]
    %v1271 = vld [vmem:[#allocation2 + $0xa4] sm:$0xf]
    %v1272 = vld [vmem:[#allocation2 + $0xa8] sm:$0xf]
    %v1273 = vld [vmem:[#allocation2 + $0xac] sm:$0xf]
    %v1274 = vld [vmem:[#allocation2 + $0xb0] sm:$0xf]
    %v1275 = vld [vmem:[#allocation2 + $0xb4] sm:$0xf]
    %v1276 = vld [vmem:[#allocation2 + $0xb8] sm:$0xf]
    %v1277 = vld [vmem:[#allocation2 + $0xbc] sm:$0xf]
    %v1278 = vld [vmem:[#allocation2 + $0xc0] sm:$0xf]
    %v1279 = vld [vmem:[#allocation2 + $0xc4] sm:$0xf]
    %v1280 = vld [vmem:[#allocation2 + $0xc8] sm:$0xf]
    %v1281 = vld [vmem:[#allocation2 + $0xcc] sm:$0xf]
    %v1282 = vld [vmem:[#allocation2 + $0xd0] sm:$0xf]
    %v1283 = vld [vmem:[#allocation2 + $0xd4] sm:$0xf]
    %v1284 = vld [vmem:[#allocation2 + $0xd8] sm:$0xf]
    %v1285 = vld [vmem:[#allocation2 + $0xdc] sm:$0xf]
    %v1286 = vld [vmem:[#allocation2 + $0xe0] sm:$0xf]
    %v1287 = vld [vmem:[#allocation2 + $0xe4] sm:$0xf]
    %v1288 = vld [vmem:[#allocation2 + $0xe8] sm:$0xf]
    %v1289 = vld [vmem:[#allocation2 + $0xec] sm:$0xf]
    %v1290 = vld [vmem:[#allocation2 + $0xf0] sm:$0xf]
    %v1291 = vld [vmem:[#allocation2 + $0xf4] sm:$0xf]
    %v1292 = vld [vmem:[#allocation2 + $0xf8] sm:$0xf]
    %v1293 = vld [vmem:[#allocation2 + $0xfc] sm:$0xf]
    %v1294 = vld [vmem:[#allocation2 + $0x100] sm:$0xf]
    %v1295 = vld [vmem:[#allocation2 + $0x104] sm:$0xf]
    %v1296 = vld [vmem:[#allocation2 + $0x108] sm:$0xf]
    %v1297 = vld [vmem:[#allocation2 + $0x10c] sm:$0xf]
    %v1298 = vld [vmem:[#allocation2 + $0x110] sm:$0xf]
    %v1299 = vld [vmem:[#allocation2 + $0x114] sm:$0xf]
    %v1300 = vld [vmem:[#allocation2 + $0x118] sm:$0xf]
    %v1301 = vld [vmem:[#allocation2 + $0x11c] sm:$0xf]
    %v1302 = vld [vmem:[#allocation2 + $0x120] sm:$0xf]
    %v1303 = vld [vmem:[#allocation2 + $0x124] sm:$0xf]
    %v1304 = vld [vmem:[#allocation2 + $0x128] sm:$0xf]
    %v1305 = vld [vmem:[#allocation2 + $0x12c] sm:$0xf]
    %v1306 = vld [vmem:[#allocation2 + $0x130] sm:$0xf]
    %v1307 = vld [vmem:[#allocation2 + $0x134] sm:$0xf]
    %v1308 = vld [vmem:[#allocation2 + $0x138] sm:$0xf]
    %v1309 = vld [vmem:[#allocation2 + $0x13c] sm:$0xf]
    %v1310 = vld [vmem:[#allocation2 + $0x140] sm:$0xf]
    %v1311 = vld [vmem:[#allocation2 + $0x144] sm:$0xf]
    %v1312 = vld [vmem:[#allocation2 + $0x148] sm:$0xf]
    %v1313 = vld [vmem:[#allocation2 + $0x14c] sm:$0xf]
    %v1314 = vld [vmem:[#allocation2 + $0x150] sm:$0xf]
    %v1315 = vld [vmem:[#allocation2 + $0x154] sm:$0xf]
    %v1316 = vld [vmem:[#allocation2 + $0x158] sm:$0xf]
    %v1317 = vld [vmem:[#allocation2 + $0x15c] sm:$0xf]
    %v1318 = vld [vmem:[#allocation2 + $0x160] sm:$0xf]
    %v1319 = vld [vmem:[#allocation2 + $0x164] sm:$0xf]
    %v1320 = vld [vmem:[#allocation2 + $0x168] sm:$0xf]
    %v1321 = vld [vmem:[#allocation2 + $0x16c] sm:$0xf]
    %v1322 = vld [vmem:[#allocation2 + $0x170] sm:$0xf]
    %v1323 = vld [vmem:[#allocation2 + $0x174] sm:$0xf]
    %v1324 = vld [vmem:[#allocation2 + $0x178] sm:$0xf]
    %v1325 = vld [vmem:[#allocation2 + $0x17c] sm:$0xf]
    %v1326 = vld [vmem:[#allocation2 + $0x180] sm:$0xf]
    %v1327 = vld [vmem:[#allocation2 + $0x184] sm:$0xf]
    %v1328 = vld [vmem:[#allocation2 + $0x188] sm:$0xf]
    %v1329 = vld [vmem:[#allocation2 + $0x18c] sm:$0xf]
    %v1330 = vld [vmem:[#allocation2 + $0x190] sm:$0xf]
    %v1331 = vld [vmem:[#allocation2 + $0x194] sm:$0xf]
    %v1332 = vld [vmem:[#allocation2 + $0x198] sm:$0xf]
    %v1333 = vld [vmem:[#allocation2 + $0x19c] sm:$0xf]
    %v1334 = vld [vmem:[#allocation2 + $0x1a0] sm:$0xf]
    %v1335 = vld [vmem:[#allocation2 + $0x1a4] sm:$0xf]
    %v1336 = vld [vmem:[#allocation2 + $0x1a8] sm:$0xf]
    %v1337 = vld [vmem:[#allocation2 + $0x1ac] sm:$0xf]
    %v1338 = vld [vmem:[#allocation2 + $0x1b0] sm:$0xf]
    %v1339 = vld [vmem:[#allocation2 + $0x1b4] sm:$0xf]
    %v1340 = vld [vmem:[#allocation2 + $0x1b8] sm:$0xf]
    %v1341 = vld [vmem:[#allocation2 + $0x1bc] sm:$0xf]
    %v1342 = vld [vmem:[#allocation2 + $0x1c0] sm:$0xf]
    %v1343 = vld [vmem:[#allocation2 + $0x1c4] sm:$0xf]
    %v1344 = vld [vmem:[#allocation2 + $0x1c8] sm:$0xf]
    %v1345 = vld [vmem:[#allocation2 + $0x1cc] sm:$0xf]
    %v1346 = vld [vmem:[#allocation2 + $0x1d0] sm:$0xf]
    %v1347 = vld [vmem:[#allocation2 + $0x1d4] sm:$0xf]
    %v1348 = vld [vmem:[#allocation2 + $0x1d8] sm:$0xf]
    %v1349 = vld [vmem:[#allocation2 + $0x1dc] sm:$0xf]
    %v1350 = vld [vmem:[#allocation2 + $0x1e0] sm:$0xf]
    %v1351 = vld [vmem:[#allocation2 + $0x1e4] sm:$0xf]
    %v1352 = vld [vmem:[#allocation2 + $0x1e8] sm:$0xf]
    %v1353 = vld [vmem:[#allocation2 + $0x1ec] sm:$0xf]
    %v1354 = vld [vmem:[#allocation2 + $0x1f0] sm:$0xf]
    %v1355 = vld [vmem:[#allocation2 + $0x1f4] sm:$0xf]
    %v1356 = vld [vmem:[#allocation2 + $0x1f8] sm:$0xf]
    %v1357 = vld [vmem:[#allocation2 + $0x1fc] sm:$0xf]
    %v1358 = vld [vmem:[#allocation2 + $0x200] sm:$0xf]
    %v1359 = vld [vmem:[#allocation2 + $0x204] sm:$0xf]
    %v1360 = vld [vmem:[#allocation2 + $0x208] sm:$0xf]
    %v1361 = vld [vmem:[#allocation2 + $0x20c] sm:$0xf]
    %v1362 = vld [vmem:[#allocation2 + $0x210] sm:$0xf]
    %v1363 = vld [vmem:[#allocation2 + $0x214] sm:$0xf]
    %v1364 = vld [vmem:[#allocation2 + $0x218] sm:$0xf]
    %v1365 = vld [vmem:[#allocation2 + $0x21c] sm:$0xf]
    %v1366 = vld [vmem:[#allocation2 + $0x220] sm:$0xf]
    %v1367 = vld [vmem:[#allocation2 + $0x224] sm:$0xf]
    %v1368 = vld [vmem:[#allocation2 + $0x228] sm:$0xf]
    %v1369 = vld [vmem:[#allocation2 + $0x22c] sm:$0xf]
    %v1370 = vld [vmem:[#allocation2 + $0x230] sm:$0xf]
    %v1371 = vld [vmem:[#allocation2 + $0x234] sm:$0xf]
    %v1372 = vld [vmem:[#allocation2 + $0x238] sm:$0xf]
    %v1373 = vld [vmem:[#allocation2 + $0x23c] sm:$0xf]
    %v1374 = vld [vmem:[#allocation2 + $0x240] sm:$0xf]
    %v1375 = vld [vmem:[#allocation2 + $0x244] sm:$0xf]
    %v1376 = vld [vmem:[#allocation2 + $0x248] sm:$0xf]
    %v1377 = vld [vmem:[#allocation2 + $0x24c] sm:$0xf]
    %v1378 = vld [vmem:[#allocation2 + $0x250] sm:$0xf]
    %v1379 = vld [vmem:[#allocation2 + $0x254] sm:$0xf]
    %v1380 = vld [vmem:[#allocation2 + $0x258] sm:$0xf]
    %v1381 = vld [vmem:[#allocation2 + $0x25c] sm:$0xf]
    %v1382 = vld [vmem:[#allocation2 + $0x260] sm:$0xf]
    %v1383 = vld [vmem:[#allocation2 + $0x264] sm:$0xf]
    %v1384 = vld [vmem:[#allocation2 + $0x268] sm:$0xf]
    %v1385 = vld [vmem:[#allocation2 + $0x26c] sm:$0xf]
    %v1386 = vld [vmem:[#allocation2 + $0x270] sm:$0xf]
    %v1387 = vld [vmem:[#allocation2 + $0x274] sm:$0xf]
    %v1388 = vld [vmem:[#allocation2 + $0x278] sm:$0xf]
    %v1389 = vld [vmem:[#allocation2 + $0x27c] sm:$0xf]
    %v1390 = vld [vmem:[#allocation2 + $0x280] sm:$0xf]
    %v1391 = vld [vmem:[#allocation2 + $0x284] sm:$0xf]
    %v1392 = vld [vmem:[#allocation2 + $0x288] sm:$0xf]
    %v1393 = vld [vmem:[#allocation2 + $0x28c] sm:$0xf]
    %v1394 = vld [vmem:[#allocation2 + $0x290] sm:$0xf]
    %v1395 = vld [vmem:[#allocation2 + $0x294] sm:$0xf]
    %v1396 = vld [vmem:[#allocation2 + $0x298] sm:$0xf]
    %v1397 = vld [vmem:[#allocation2 + $0x29c] sm:$0xf]
    %v1398 = vld [vmem:[#allocation2 + $0x2a0] sm:$0xf]
    %v1399 = vld [vmem:[#allocation2 + $0x2a4] sm:$0xf]
    %v1400 = vld [vmem:[#allocation2 + $0x2a8] sm:$0xf]
    %v1401 = vld [vmem:[#allocation2 + $0x2ac] sm:$0xf]
    %v1402 = vld [vmem:[#allocation2 + $0x2b0] sm:$0xf]
    %v1403 = vld [vmem:[#allocation2 + $0x2b4] sm:$0xf]
    %v1404 = vld [vmem:[#allocation2 + $0x2b8] sm:$0xf]
    %v1405 = vld [vmem:[#allocation2 + $0x2bc] sm:$0xf]
    %v1406 = vld [vmem:[#allocation2 + $0x2c0] sm:$0xf]
    %v1407 = vld [vmem:[#allocation2 + $0x2c4] sm:$0xf]
    %v1408 = vld [vmem:[#allocation2 + $0x2c8] sm:$0xf]
    %v1409 = vld [vmem:[#allocation2 + $0x2cc] sm:$0xf]
    %v1410 = vld [vmem:[#allocation2 + $0x2d0] sm:$0xf]
    %v1411 = vld [vmem:[#allocation2 + $0x2d4] sm:$0xf]
    %v1412 = vld [vmem:[#allocation2 + $0x2d8] sm:$0xf]
    %v1413 = vld [vmem:[#allocation2 + $0x2dc] sm:$0xf]
    %v1414 = vld [vmem:[#allocation2 + $0x2e0] sm:$0xf]
    %v1415 = vld [vmem:[#allocation2 + $0x2e4] sm:$0xf]
    %v1416 = vld [vmem:[#allocation2 + $0x2e8] sm:$0xf]
    %v1417 = vld [vmem:[#allocation2 + $0x2ec] sm:$0xf]
    %v1418 = vld [vmem:[#allocation2 + $0x2f0] sm:$0xf]
    %v1419 = vld [vmem:[#allocation2 + $0x2f4] sm:$0xf]
    %v1420 = vld [vmem:[#allocation2 + $0x2f8] sm:$0xf]
    %v1421 = vld [vmem:[#allocation2 + $0x2fc] sm:$0xf]
    %v1422 = vld [vmem:[#allocation2 + $0x300] sm:$0xf]
    %v1423 = vld [vmem:[#allocation2 + $0x304] sm:$0xf]
    %v1424 = vld [vmem:[#allocation2 + $0x308] sm:$0xf]
    %v1425 = vld [vmem:[#allocation2 + $0x30c] sm:$0xf]
    %v1426 = vld [vmem:[#allocation2 + $0x310] sm:$0xf]
    %v1427 = vld [vmem:[#allocation2 + $0x314] sm:$0xf]
    %v1428 = vld [vmem:[#allocation2 + $0x318] sm:$0xf]
    %v1429 = vld [vmem:[#allocation2 + $0x31c] sm:$0xf]
    %v1430 = vld [vmem:[#allocation2 + $0x320] sm:$0xf]
    %v1431 = vld [vmem:[#allocation2 + $0x324] sm:$0xf]
    %v1432 = vld [vmem:[#allocation2 + $0x328] sm:$0xf]
    %v1433 = vld [vmem:[#allocation2 + $0x32c] sm:$0xf]
    %v1434 = vld [vmem:[#allocation2 + $0x330] sm:$0xf]
    %v1435 = vld [vmem:[#allocation2 + $0x334] sm:$0xf]
    %v1436 = vld [vmem:[#allocation2 + $0x338] sm:$0xf]
    %v1437 = vld [vmem:[#allocation2 + $0x33c] sm:$0xf]
    %v1438 = vld [vmem:[#allocation2 + $0x340] sm:$0xf]
    %v1439 = vld [vmem:[#allocation2 + $0x344] sm:$0xf]
    %v1440 = vld [vmem:[#allocation2 + $0x348] sm:$0xf]
    %v1441 = vld [vmem:[#allocation2 + $0x34c] sm:$0xf]
    %v1442 = vld [vmem:[#allocation2 + $0x350] sm:$0xf]
    %v1443 = vld [vmem:[#allocation2 + $0x354] sm:$0xf]
    %v1444 = vld [vmem:[#allocation2 + $0x358] sm:$0xf]
    %v1445 = vld [vmem:[#allocation2 + $0x35c] sm:$0xf]
    %v1446 = vld [vmem:[#allocation2 + $0x360] sm:$0xf]
    %v1447 = vld [vmem:[#allocation2 + $0x364] sm:$0xf]
    %v1448 = vld [vmem:[#allocation2 + $0x368] sm:$0xf]
    %v1449 = vld [vmem:[#allocation2 + $0x36c] sm:$0xf]
    %v1450 = vld [vmem:[#allocation2 + $0x370] sm:$0xf]
    %v1451 = vld [vmem:[#allocation2 + $0x374] sm:$0xf]
    %v1452 = vld [vmem:[#allocation2 + $0x378] sm:$0xf]
    %v1453 = vld [vmem:[#allocation2 + $0x37c] sm:$0xf]
    %v1454 = vld [vmem:[#allocation2 + $0x380] sm:$0xf]
    %v1455 = vld [vmem:[#allocation2 + $0x384] sm:$0xf]
    %v1456 = vld [vmem:[#allocation2 + $0x388] sm:$0xf]
    %v1457 = vld [vmem:[#allocation2 + $0x38c] sm:$0xf]
    %v1458 = vld [vmem:[#allocation2 + $0x390] sm:$0xf]
    %v1459 = vld [vmem:[#allocation2 + $0x394] sm:$0xf]
    %v1460 = vld [vmem:[#allocation2 + $0x398] sm:$0xf]
    %v1461 = vld [vmem:[#allocation2 + $0x39c] sm:$0xf]
    %v1462 = vld [vmem:[#allocation2 + $0x3a0] sm:$0xf]
    %v1463 = vld [vmem:[#allocation2 + $0x3a4] sm:$0xf]
    %v1464 = vld [vmem:[#allocation2 + $0x3a8] sm:$0xf]
    %v1465 = vld [vmem:[#allocation2 + $0x3ac] sm:$0xf]
    %v1466 = vld [vmem:[#allocation2 + $0x3b0] sm:$0xf]
    %v1467 = vld [vmem:[#allocation2 + $0x3b4] sm:$0xf]
    %v1468 = vld [vmem:[#allocation2 + $0x3b8] sm:$0xf]
    %v1469 = vld [vmem:[#allocation2 + $0x3bc] sm:$0xf]
    %v1470 = vld [vmem:[#allocation2 + $0x3c0] sm:$0xf]
    %v1471 = vld [vmem:[#allocation2 + $0x3c4] sm:$0xf]
    %v1472 = vld [vmem:[#allocation2 + $0x3c8] sm:$0xf]
    %v1473 = vld [vmem:[#allocation2 + $0x3cc] sm:$0xf]
    %v1474 = vld [vmem:[#allocation2 + $0x3d0] sm:$0xf]
    %v1475 = vld [vmem:[#allocation2 + $0x3d4] sm:$0xf]
    %v1476 = vld [vmem:[#allocation2 + $0x3d8] sm:$0xf]
    %v1477 = vld [vmem:[#allocation2 + $0x3dc] sm:$0xf]
    %v1478 = vld [vmem:[#allocation2 + $0x3e0] sm:$0xf]
    %v1479 = vld [vmem:[#allocation2 + $0x3e4] sm:$0xf]
    %v1480 = vld [vmem:[#allocation2 + $0x3e8] sm:$0xf]
    %v1481 = vld [vmem:[#allocation2 + $0x3ec] sm:$0xf]
    %v1482 = vld [vmem:[#allocation2 + $0x3f0] sm:$0xf]
    %v1483 = vld [vmem:[#allocation2 + $0x3f4] sm:$0xf]
    %v1484 = vld [vmem:[#allocation2 + $0x3f8] sm:$0xf]
    %v1485 = vld [vmem:[#allocation2 + $0x3fc] sm:$0xf]
    %v1486 = vld [vmem:[%s2] sm:$0x1]
    %v1488 = vlaneseq
    %v1489 = vshrl.u32 %v1488, 7
    %v1490 = vsub.s32 0, %v1489
    %v1491 = vrot.slane %v1486, %v1490
    %v1749 = vunpack.c.l.b16 %v1230
    %v1750 = vunpack.c.l.b16 %v1231
    %v1751 = vunpack.c.l.b16 %v1232
    %v1752 = vunpack.c.l.b16 %v1233
    %v1753 = vunpack.c.l.b16 %v1234
    %v1754 = vunpack.c.l.b16 %v1235
    %v1755 = vunpack.c.l.b16 %v1236
    %v1756 = vunpack.c.l.b16 %v1237
    %v1757 = vunpack.c.l.b16 %v1238
    %v1758 = vunpack.c.l.b16 %v1239
    %v1759 = vunpack.c.l.b16 %v1240
    %v1760 = vunpack.c.l.b16 %v1241
    %v1761 = vunpack.c.l.b16 %v1242
    %v1762 = vunpack.c.l.b16 %v1243
    %v1763 = vunpack.c.l.b16 %v1244
    %v1764 = vunpack.c.l.b16 %v1245
    %v1765 = vunpack.c.l.b16 %v1246
    %v1766 = vunpack.c.l.b16 %v1247
    %v1767 = vunpack.c.l.b16 %v1248
    %v1768 = vunpack.c.l.b16 %v1249
    %v1769 = vunpack.c.l.b16 %v1250
    %v1770 = vunpack.c.l.b16 %v1251
    %v1771 = vunpack.c.l.b16 %v1252
    %v1772 = vunpack.c.l.b16 %v1253
    %v1773 = vunpack.c.l.b16 %v1254
    %v1774 = vunpack.c.l.b16 %v1255
    %v1775 = vunpack.c.l.b16 %v1256
    %v1776 = vunpack.c.l.b16 %v1257
    %v1777 = vunpack.c.l.b16 %v1258
    %v1778 = vunpack.c.l.b16 %v1259
    %v1779 = vunpack.c.l.b16 %v1260
    %v1780 = vunpack.c.l.b16 %v1261
    %v1781 = vunpack.c.l.b16 %v1262
    %v1782 = vunpack.c.l.b16 %v1263
    %v1783 = vunpack.c.l.b16 %v1264
    %v1784 = vunpack.c.l.b16 %v1265
    %v1785 = vunpack.c.l.b16 %v1266
    %v1786 = vunpack.c.l.b16 %v1267
    %v1787 = vunpack.c.l.b16 %v1268
    %v1788 = vunpack.c.l.b16 %v1269
    %v1789 = vunpack.c.l.b16 %v1270
    %v1790 = vunpack.c.l.b16 %v1271
    %v1791 = vunpack.c.l.b16 %v1272
    %v1792 = vunpack.c.l.b16 %v1273
    %v1793 = vunpack.c.l.b16 %v1274
    %v1794 = vunpack.c.l.b16 %v1275
    %v1795 = vunpack.c.l.b16 %v1276
    %v1796 = vunpack.c.l.b16 %v1277
    %v1797 = vunpack.c.l.b16 %v1278
    %v1798 = vunpack.c.l.b16 %v1279
    %v1799 = vunpack.c.l.b16 %v1280
    %v1800 = vunpack.c.l.b16 %v1281
    %v1801 = vunpack.c.l.b16 %v1282
    %v1802 = vunpack.c.l.b16 %v1283
    %v1803 = vunpack.c.l.b16 %v1284
    %v1804 = vunpack.c.l.b16 %v1285
    %v1805 = vunpack.c.l.b16 %v1286
    %v1806 = vunpack.c.l.b16 %v1287
    %v1807 = vunpack.c.l.b16 %v1288
    %v1808 = vunpack.c.l.b16 %v1289
    %v1809 = vunpack.c.l.b16 %v1290
    %v1810 = vunpack.c.l.b16 %v1291
    %v1811 = vunpack.c.l.b16 %v1292
    %v1812 = vunpack.c.l.b16 %v1293
    %v1813 = vunpack.c.l.b16 %v1294
    %v1814 = vunpack.c.l.b16 %v1295
    %v1815 = vunpack.c.l.b16 %v1296
    %v1816 = vunpack.c.l.b16 %v1297
    %v1817 = vunpack.c.l.b16 %v1298
    %v1818 = vunpack.c.l.b16 %v1299
    %v1819 = vunpack.c.l.b16 %v1300
    %v1820 = vunpack.c.l.b16 %v1301
    %v1821 = vunpack.c.l.b16 %v1302
    %v1822 = vunpack.c.l.b16 %v1303
    %v1823 = vunpack.c.l.b16 %v1304
    %v1824 = vunpack.c.l.b16 %v1305
    %v1825 = vunpack.c.l.b16 %v1306
    %v1826 = vunpack.c.l.b16 %v1307
    %v1827 = vunpack.c.l.b16 %v1308
    %v1828 = vunpack.c.l.b16 %v1309
    %v1829 = vunpack.c.l.b16 %v1310
    %v1830 = vunpack.c.l.b16 %v1311
    %v1831 = vunpack.c.l.b16 %v1312
    %v1832 = vunpack.c.l.b16 %v1313
    %v1833 = vunpack.c.l.b16 %v1314
    %v1834 = vunpack.c.l.b16 %v1315
    %v1835 = vunpack.c.l.b16 %v1316
    %v1836 = vunpack.c.l.b16 %v1317
    %v1837 = vunpack.c.l.b16 %v1318
    %v1838 = vunpack.c.l.b16 %v1319
    %v1839 = vunpack.c.l.b16 %v1320
    %v1840 = vunpack.c.l.b16 %v1321
    %v1841 = vunpack.c.l.b16 %v1322
    %v1842 = vunpack.c.l.b16 %v1323
    %v1843 = vunpack.c.l.b16 %v1324
    %v1844 = vunpack.c.l.b16 %v1325
    %v1845 = vunpack.c.l.b16 %v1326
    %v1846 = vunpack.c.l.b16 %v1327
    %v1847 = vunpack.c.l.b16 %v1328
    %v1848 = vunpack.c.l.b16 %v1329
    %v1849 = vunpack.c.l.b16 %v1330
    %v1850 = vunpack.c.l.b16 %v1331
    %v1851 = vunpack.c.l.b16 %v1332
    %v1852 = vunpack.c.l.b16 %v1333
    %v1853 = vunpack.c.l.b16 %v1334
    %v1854 = vunpack.c.l.b16 %v1335
    %v1855 = vunpack.c.l.b16 %v1336
    %v1856 = vunpack.c.l.b16 %v1337
    %v1857 = vunpack.c.l.b16 %v1338
    %v1858 = vunpack.c.l.b16 %v1339
    %v1859 = vunpack.c.l.b16 %v1340
    %v1860 = vunpack.c.l.b16 %v1341
    %v1861 = vunpack.c.l.b16 %v1342
    %v1862 = vunpack.c.l.b16 %v1343
    %v1863 = vunpack.c.l.b16 %v1344
    %v1864 = vunpack.c.l.b16 %v1345
    %v1865 = vunpack.c.l.b16 %v1346
    %v1866 = vunpack.c.l.b16 %v1347
    %v1867 = vunpack.c.l.b16 %v1348
    %v1868 = vunpack.c.l.b16 %v1349
    %v1869 = vunpack.c.l.b16 %v1350
    %v1870 = vunpack.c.l.b16 %v1351
    %v1871 = vunpack.c.l.b16 %v1352
    %v1872 = vunpack.c.l.b16 %v1353
    %v1873 = vunpack.c.l.b16 %v1354
    %v1874 = vunpack.c.l.b16 %v1355
    %v1875 = vunpack.c.l.b16 %v1356
    %v1876 = vunpack.c.l.b16 %v1357
    %v1877 = vunpack.c.l.b16 %v1358
    %v1878 = vunpack.c.l.b16 %v1359
    %v1879 = vunpack.c.l.b16 %v1360
    %v1880 = vunpack.c.l.b16 %v1361
    %v1881 = vunpack.c.l.b16 %v1362
    %v1882 = vunpack.c.l.b16 %v1363
    %v1883 = vunpack.c.l.b16 %v1364
    %v1884 = vunpack.c.l.b16 %v1365
    %v1885 = vunpack.c.l.b16 %v1366
    %v1886 = vunpack.c.l.b16 %v1367
    %v1887 = vunpack.c.l.b16 %v1368
    %v1888 = vunpack.c.l.b16 %v1369
    %v1889 = vunpack.c.l.b16 %v1370
    %v1890 = vunpack.c.l.b16 %v1371
    %v1891 = vunpack.c.l.b16 %v1372
    %v1892 = vunpack.c.l.b16 %v1373
    %v1893 = vunpack.c.l.b16 %v1374
    %v1894 = vunpack.c.l.b16 %v1375
    %v1895 = vunpack.c.l.b16 %v1376
    %v1896 = vunpack.c.l.b16 %v1377
    %v1897 = vunpack.c.l.b16 %v1378
    %v1898 = vunpack.c.l.b16 %v1379
    %v1899 = vunpack.c.l.b16 %v1380
    %v1900 = vunpack.c.l.b16 %v1381
    %v1901 = vunpack.c.l.b16 %v1382
    %v1902 = vunpack.c.l.b16 %v1383
    %v1903 = vunpack.c.l.b16 %v1384
    %v1904 = vunpack.c.l.b16 %v1385
    %v1905 = vunpack.c.l.b16 %v1386
    %v1906 = vunpack.c.l.b16 %v1387
    %v1907 = vunpack.c.l.b16 %v1388
    %v1908 = vunpack.c.l.b16 %v1389
    %v1909 = vunpack.c.l.b16 %v1390
    %v1910 = vunpack.c.l.b16 %v1391
    %v1911 = vunpack.c.l.b16 %v1392
    %v1912 = vunpack.c.l.b16 %v1393
    %v1913 = vunpack.c.l.b16 %v1394
    %v1914 = vunpack.c.l.b16 %v1395
    %v1915 = vunpack.c.l.b16 %v1396
    %v1916 = vunpack.c.l.b16 %v1397
    %v1917 = vunpack.c.l.b16 %v1398
    %v1918 = vunpack.c.l.b16 %v1399
    %v1919 = vunpack.c.l.b16 %v1400
    %v1920 = vunpack.c.l.b16 %v1401
    %v1921 = vunpack.c.l.b16 %v1402
    %v1922 = vunpack.c.l.b16 %v1403
    %v1923 = vunpack.c.l.b16 %v1404
    %v1924 = vunpack.c.l.b16 %v1405
    %v1925 = vunpack.c.l.b16 %v1406
    %v1926 = vunpack.c.l.b16 %v1407
    %v1927 = vunpack.c.l.b16 %v1408
    %v1928 = vunpack.c.l.b16 %v1409
    %v1929 = vunpack.c.l.b16 %v1410
    %v1930 = vunpack.c.l.b16 %v1411
    %v1931 = vunpack.c.l.b16 %v1412
    %v1932 = vunpack.c.l.b16 %v1413
    %v1933 = vunpack.c.l.b16 %v1414
    %v1934 = vunpack.c.l.b16 %v1415
    %v1935 = vunpack.c.l.b16 %v1416
    %v1936 = vunpack.c.l.b16 %v1417
    %v1937 = vunpack.c.l.b16 %v1418
    %v1938 = vunpack.c.l.b16 %v1419
    %v1939 = vunpack.c.l.b16 %v1420
    %v1940 = vunpack.c.l.b16 %v1421
    %v1941 = vunpack.c.l.b16 %v1422
    %v1942 = vunpack.c.l.b16 %v1423
    %v1943 = vunpack.c.l.b16 %v1424
    %v1944 = vunpack.c.l.b16 %v1425
    %v1945 = vunpack.c.l.b16 %v1426
    %v1946 = vunpack.c.l.b16 %v1427
    %v1947 = vunpack.c.l.b16 %v1428
    %v1948 = vunpack.c.l.b16 %v1429
    %v1949 = vunpack.c.l.b16 %v1430
    %v1950 = vunpack.c.l.b16 %v1431
    %v1951 = vunpack.c.l.b16 %v1432
    %v1952 = vunpack.c.l.b16 %v1433
    %v1953 = vunpack.c.l.b16 %v1434
    %v1954 = vunpack.c.l.b16 %v1435
    %v1955 = vunpack.c.l.b16 %v1436
    %v1956 = vunpack.c.l.b16 %v1437
    %v1957 = vunpack.c.l.b16 %v1438
    %v1958 = vunpack.c.l.b16 %v1439
    %v1959 = vunpack.c.l.b16 %v1440
    %v1960 = vunpack.c.l.b16 %v1441
    %v1961 = vunpack.c.l.b16 %v1442
    %v1962 = vunpack.c.l.b16 %v1443
    %v1963 = vunpack.c.l.b16 %v1444
    %v1964 = vunpack.c.l.b16 %v1445
    %v1965 = vunpack.c.l.b16 %v1446
    %v1966 = vunpack.c.l.b16 %v1447
    %v1967 = vunpack.c.l.b16 %v1448
    %v1968 = vunpack.c.l.b16 %v1449
    %v1969 = vunpack.c.l.b16 %v1450
    %v1970 = vunpack.c.l.b16 %v1451
    %v1971 = vunpack.c.l.b16 %v1452
    %v1972 = vunpack.c.l.b16 %v1453
    %v1973 = vunpack.c.l.b16 %v1454
    %v1974 = vunpack.c.l.b16 %v1455
    %v1975 = vunpack.c.l.b16 %v1456
    %v1976 = vunpack.c.l.b16 %v1457
    %v1977 = vunpack.c.l.b16 %v1458
    %v1978 = vunpack.c.l.b16 %v1459
    %v1979 = vunpack.c.l.b16 %v1460
    %v1980 = vunpack.c.l.b16 %v1461
    %v1981 = vunpack.c.l.b16 %v1462
    %v1982 = vunpack.c.l.b16 %v1463
    %v1983 = vunpack.c.l.b16 %v1464
    %v1984 = vunpack.c.l.b16 %v1465
    %v1985 = vunpack.c.l.b16 %v1466
    %v1986 = vunpack.c.l.b16 %v1467
    %v1987 = vunpack.c.l.b16 %v1468
    %v1988 = vunpack.c.l.b16 %v1469
    %v1989 = vunpack.c.l.b16 %v1470
    %v1990 = vunpack.c.l.b16 %v1471
    %v1991 = vunpack.c.l.b16 %v1472
    %v1992 = vunpack.c.l.b16 %v1473
    %v1993 = vunpack.c.l.b16 %v1474
    %v1994 = vunpack.c.l.b16 %v1475
    %v1995 = vunpack.c.l.b16 %v1476
    %v1996 = vunpack.c.l.b16 %v1477
    %v1997 = vunpack.c.l.b16 %v1478
    %v1998 = vunpack.c.l.b16 %v1479
    %v1999 = vunpack.c.l.b16 %v1480
    %v2000 = vunpack.c.l.b16 %v1481
    %v2001 = vunpack.c.l.b16 %v1482
    %v2002 = vunpack.c.l.b16 %v1483
    %v2003 = vunpack.c.l.b16 %v1484
    %v2004 = vunpack.c.l.b16 %v1485
    %v2005 = vpack.c.b16 %v1750, %v1749
    %v2006 = vpack.c.b16 %v1752, %v1751
    %v2007 = vpack.c.b16 %v1754, %v1753
    %v2008 = vpack.c.b16 %v1756, %v1755
    %v2009 = vpack.c.b16 %v1758, %v1757
    %v2010 = vpack.c.b16 %v1760, %v1759
    %v2011 = vpack.c.b16 %v1762, %v1761
    %v2012 = vpack.c.b16 %v1764, %v1763
    %v2013 = vpack.c.b16 %v1766, %v1765
    %v2014 = vpack.c.b16 %v1768, %v1767
    %v2015 = vpack.c.b16 %v1770, %v1769
    %v2016 = vpack.c.b16 %v1772, %v1771
    %v2017 = vpack.c.b16 %v1774, %v1773
    %v2018 = vpack.c.b16 %v1776, %v1775
    %v2019 = vpack.c.b16 %v1778, %v1777
    %v2020 = vpack.c.b16 %v1780, %v1779
    %v2021 = vpack.c.b16 %v1782, %v1781
    %v2022 = vpack.c.b16 %v1784, %v1783
    %v2023 = vpack.c.b16 %v1786, %v1785
    %v2024 = vpack.c.b16 %v1788, %v1787
    %v2025 = vpack.c.b16 %v1790, %v1789
    %v2026 = vpack.c.b16 %v1792, %v1791
    %v2027 = vpack.c.b16 %v1794, %v1793
    %v2028 = vpack.c.b16 %v1796, %v1795
    %v2029 = vpack.c.b16 %v1798, %v1797
    %v2030 = vpack.c.b16 %v1800, %v1799
    %v2031 = vpack.c.b16 %v1802, %v1801
    %v2032 = vpack.c.b16 %v1804, %v1803
    %v2033 = vpack.c.b16 %v1806, %v1805
    %v2034 = vpack.c.b16 %v1808, %v1807
    %v2035 = vpack.c.b16 %v1810, %v1809
    %v2036 = vpack.c.b16 %v1812, %v1811
    %v2037 = vpack.c.b16 %v1814, %v1813
    %v2038 = vpack.c.b16 %v1816, %v1815
    %v2039 = vpack.c.b16 %v1818, %v1817
    %v2040 = vpack.c.b16 %v1820, %v1819
    %v2041 = vpack.c.b16 %v1822, %v1821
    %v2042 = vpack.c.b16 %v1824, %v1823
    %v2043 = vpack.c.b16 %v1826, %v1825
    %v2044 = vpack.c.b16 %v1828, %v1827
    %v2045 = vpack.c.b16 %v1830, %v1829
    %v2046 = vpack.c.b16 %v1832, %v1831
    %v2047 = vpack.c.b16 %v1834, %v1833
    %v2048 = vpack.c.b16 %v1836, %v1835
    %v2049 = vpack.c.b16 %v1838, %v1837
    %v2050 = vpack.c.b16 %v1840, %v1839
    %v2051 = vpack.c.b16 %v1842, %v1841
    %v2052 = vpack.c.b16 %v1844, %v1843
    %v2053 = vpack.c.b16 %v1846, %v1845
    %v2054 = vpack.c.b16 %v1848, %v1847
    %v2055 = vpack.c.b16 %v1850, %v1849
    %v2056 = vpack.c.b16 %v1852, %v1851
    %v2057 = vpack.c.b16 %v1854, %v1853
    %v2058 = vpack.c.b16 %v1856, %v1855
    %v2059 = vpack.c.b16 %v1858, %v1857
    %v2060 = vpack.c.b16 %v1860, %v1859
    %v2061 = vpack.c.b16 %v1862, %v1861
    %v2062 = vpack.c.b16 %v1864, %v1863
    %v2063 = vpack.c.b16 %v1866, %v1865
    %v2064 = vpack.c.b16 %v1868, %v1867
    %v2065 = vpack.c.b16 %v1870, %v1869
    %v2066 = vpack.c.b16 %v1872, %v1871
    %v2067 = vpack.c.b16 %v1874, %v1873
    %v2068 = vpack.c.b16 %v1876, %v1875
    %v2069 = vpack.c.b16 %v1878, %v1877
    %v2070 = vpack.c.b16 %v1880, %v1879
    %v2071 = vpack.c.b16 %v1882, %v1881
    %v2072 = vpack.c.b16 %v1884, %v1883
    %v2073 = vpack.c.b16 %v1886, %v1885
    %v2074 = vpack.c.b16 %v1888, %v1887
    %v2075 = vpack.c.b16 %v1890, %v1889
    %v2076 = vpack.c.b16 %v1892, %v1891
    %v2077 = vpack.c.b16 %v1894, %v1893
    %v2078 = vpack.c.b16 %v1896, %v1895
    %v2079 = vpack.c.b16 %v1898, %v1897
    %v2080 = vpack.c.b16 %v1900, %v1899
    %v2081 = vpack.c.b16 %v1902, %v1901
    %v2082 = vpack.c.b16 %v1904, %v1903
    %v2083 = vpack.c.b16 %v1906, %v1905
    %v2084 = vpack.c.b16 %v1908, %v1907
    %v2085 = vpack.c.b16 %v1910, %v1909
    %v2086 = vpack.c.b16 %v1912, %v1911
    %v2087 = vpack.c.b16 %v1914, %v1913
    %v2088 = vpack.c.b16 %v1916, %v1915
    %v2089 = vpack.c.b16 %v1918, %v1917
    %v2090 = vpack.c.b16 %v1920, %v1919
    %v2091 = vpack.c.b16 %v1922, %v1921
    %v2092 = vpack.c.b16 %v1924, %v1923
    %v2093 = vpack.c.b16 %v1926, %v1925
    %v2094 = vpack.c.b16 %v1928, %v1927
    %v2095 = vpack.c.b16 %v1930, %v1929
    %v2096 = vpack.c.b16 %v1932, %v1931
    %v2097 = vpack.c.b16 %v1934, %v1933
    %v2098 = vpack.c.b16 %v1936, %v1935
    %v2099 = vpack.c.b16 %v1938, %v1937
    %v2100 = vpack.c.b16 %v1940, %v1939
    %v2101 = vpack.c.b16 %v1942, %v1941
    %v2102 = vpack.c.b16 %v1944, %v1943
    %v2103 = vpack.c.b16 %v1946, %v1945
    %v2104 = vpack.c.b16 %v1948, %v1947
    %v2105 = vpack.c.b16 %v1950, %v1949
    %v2106 = vpack.c.b16 %v1952, %v1951
    %v2107 = vpack.c.b16 %v1954, %v1953
    %v2108 = vpack.c.b16 %v1956, %v1955
    %v2109 = vpack.c.b16 %v1958, %v1957
    %v2110 = vpack.c.b16 %v1960, %v1959
    %v2111 = vpack.c.b16 %v1962, %v1961
    %v2112 = vpack.c.b16 %v1964, %v1963
    %v2113 = vpack.c.b16 %v1966, %v1965
    %v2114 = vpack.c.b16 %v1968, %v1967
    %v2115 = vpack.c.b16 %v1970, %v1969
    %v2116 = vpack.c.b16 %v1972, %v1971
    %v2117 = vpack.c.b16 %v1974, %v1973
    %v2118 = vpack.c.b16 %v1976, %v1975
    %v2119 = vpack.c.b16 %v1978, %v1977
    %v2120 = vpack.c.b16 %v1980, %v1979
    %v2121 = vpack.c.b16 %v1982, %v1981
    %v2122 = vpack.c.b16 %v1984, %v1983
    %v2123 = vpack.c.b16 %v1986, %v1985
    %v2124 = vpack.c.b16 %v1988, %v1987
    %v2125 = vpack.c.b16 %v1990, %v1989
    %v2126 = vpack.c.b16 %v1992, %v1991
    %v2127 = vpack.c.b16 %v1994, %v1993
    %v2128 = vpack.c.b16 %v1996, %v1995
    %v2129 = vpack.c.b16 %v1998, %v1997
    %v2130 = vpack.c.b16 %v2000, %v1999
    %v2131 = vpack.c.b16 %v2002, %v2001
    %v2132 = vpack.c.b16 %v2004, %v2003
    %2261 = vmatprep.subr.bf16.mxu0 0
    %2262 = vmatpush1.bf16.msra.mxu0 %v2005
    %2263 = vmatprep.subr.bf16.mxu0 0
    %2264 = vmatpush1.bf16.msra.mxu0 %v2006
    %2265 = vmatprep.subr.bf16.mxu0 0
    %2266 = vmatpush1.bf16.msra.mxu0 %v2007
    %2267 = vmatprep.subr.bf16.mxu0 0
    %2268 = vmatpush1.bf16.msra.mxu0 %v2008
    %2269 = vmatprep.subr.bf16.mxu0 0
    %2270 = vmatpush1.bf16.msra.mxu0 %v2009
    %2271 = vmatprep.subr.bf16.mxu0 0
    %2272 = vmatpush1.bf16.msra.mxu0 %v2010
    %2273 = vmatprep.subr.bf16.mxu0 0
    %2274 = vmatpush1.bf16.msra.mxu0 %v2011
    %2275 = vmatprep.subr.bf16.mxu0 0
    %2276 = vmatpush1.bf16.msra.mxu0 %v2012
    %2277 = vmatprep.subr.bf16.mxu0 0
    %2278 = vmatpush1.bf16.msra.mxu0 %v2013
    %2279 = vmatprep.subr.bf16.mxu0 0
    %2280 = vmatpush1.bf16.msra.mxu0 %v2014
    %2281 = vmatprep.subr.bf16.mxu0 0
    %2282 = vmatpush1.bf16.msra.mxu0 %v2015
    %2283 = vmatprep.subr.bf16.mxu0 0
    %2284 = vmatpush1.bf16.msra.mxu0 %v2016
    %2285 = vmatprep.subr.bf16.mxu0 0
    %2286 = vmatpush1.bf16.msra.mxu0 %v2017
    %2287 = vmatprep.subr.bf16.mxu0 0
    %2288 = vmatpush1.bf16.msra.mxu0 %v2018
    %2289 = vmatprep.subr.bf16.mxu0 0
    %2290 = vmatpush1.bf16.msra.mxu0 %v2019
    %2291 = vmatprep.subr.bf16.mxu0 0
    %2292 = vmatpush1.bf16.msra.mxu0 %v2020
    %2293 = vmatprep.mubr.bf16.mxu0 %v1186
    %2294 = vmatmul.mubr.bf16.gmra.mrb[0].mxu0 %v1183
    %v2295 = vpop.f32.mrb[0].mxu0
    %v2296 = vadd.f32 %v1491, %v2295
    %v2297 = vpop.f32.mrb[0].mxu0
    %v2298 = vpop.f32.mrb[0].mxu0
    %v2299 = vpop.f32.mrb[0].mxu0
    %2300 = vdwg.mxu0
    %2301 = vmatprep.subr.bf16.mxu0 0
    %2302 = vmatpush1.bf16.msra.mxu0 %v2021
    %2303 = vmatprep.subr.bf16.mxu0 0
    %2304 = vmatpush1.bf16.msra.mxu0 %v2022
    %2305 = vmatprep.subr.bf16.mxu0 0
    %2306 = vmatpush1.bf16.msra.mxu0 %v2023
    %2307 = vmatprep.subr.bf16.mxu0 0
    %2308 = vmatpush1.bf16.msra.mxu0 %v2024
    %2309 = vmatprep.subr.bf16.mxu0 0
    %2310 = vmatpush1.bf16.msra.mxu0 %v2025
    %2311 = vmatprep.subr.bf16.mxu0 0
    %2312 = vmatpush1.bf16.msra.mxu0 %v2026
    %2313 = vmatprep.subr.bf16.mxu0 0
    %2314 = vmatpush1.bf16.msra.mxu0 %v2027
    %2315 = vmatprep.subr.bf16.mxu0 0
    %2316 = vmatpush1.bf16.msra.mxu0 %v2028
    %2317 = vmatprep.subr.bf16.mxu0 0
    %2318 = vmatpush1.bf16.msra.mxu0 %v2029
    %2319 = vmatprep.subr.bf16.mxu0 0
    %2320 = vmatpush1.bf16.msra.mxu0 %v2030
    %2321 = vmatprep.subr.bf16.mxu0 0
    %2322 = vmatpush1.bf16.msra.mxu0 %v2031
    %2323 = vmatprep.subr.bf16.mxu0 0
    %2324 = vmatpush1.bf16.msra.mxu0 %v2032
    %2325 = vmatprep.subr.bf16.mxu0 0
    %2326 = vmatpush1.bf16.msra.mxu0 %v2033
    %2327 = vmatprep.subr.bf16.mxu0 0
    %2328 = vmatpush1.bf16.msra.mxu0 %v2034
    %2329 = vmatprep.subr.bf16.mxu0 0
    %2330 = vmatpush1.bf16.msra.mxu0 %v2035
    %2331 = vmatprep.subr.bf16.mxu0 0
    %2332 = vmatpush1.bf16.msra.mxu0 %v2036
    %2333 = vmatprep.mubr.bf16.mxu0 %v1192
    %2334 = vmatmul.mubr.bf16.gmra.mrb[0].mxu0 %v1189
    %v2335 = vpop.f32.mrb[0].mxu0
    %v2336 = vadd.f32 %v2296, %v2335
    %v2337 = vpop.f32.mrb[0].mxu0
    %v2338 = vpop.f32.mrb[0].mxu0
    %v2339 = vpop.f32.mrb[0].mxu0
    %2340 = vdwg.mxu0
    %2341 = vmatprep.subr.bf16.mxu0 0
    %2342 = vmatpush1.bf16.msra.mxu0 %v2037
    %2343 = vmatprep.subr.bf16.mxu0 0
    %2344 = vmatpush1.bf16.msra.mxu0 %v2038
    %2345 = vmatprep.subr.bf16.mxu0 0
    %2346 = vmatpush1.bf16.msra.mxu0 %v2039
    %2347 = vmatprep.subr.bf16.mxu0 0
    %2348 = vmatpush1.bf16.msra.mxu0 %v2040
    %2349 = vmatprep.subr.bf16.mxu0 0
    %2350 = vmatpush1.bf16.msra.mxu0 %v2041
    %2351 = vmatprep.subr.bf16.mxu0 0
    %2352 = vmatpush1.bf16.msra.mxu0 %v2042
    %2353 = vmatprep.subr.bf16.mxu0 0
    %2354 = vmatpush1.bf16.msra.mxu0 %v2043
    %2355 = vmatprep.subr.bf16.mxu0 0
    %2356 = vmatpush1.bf16.msra.mxu0 %v2044
    %2357 = vmatprep.subr.bf16.mxu0 0
    %2358 = vmatpush1.bf16.msra.mxu0 %v2045
    %2359 = vmatprep.subr.bf16.mxu0 0
    %2360 = vmatpush1.bf16.msra.mxu0 %v2046
    %2361 = vmatprep.subr.bf16.mxu0 0
    %2362 = vmatpush1.bf16.msra.mxu0 %v2047
    %2363 = vmatprep.subr.bf16.mxu0 0
    %2364 = vmatpush1.bf16.msra.mxu0 %v2048
    %2365 = vmatprep.subr.bf16.mxu0 0
    %2366 = vmatpush1.bf16.msra.mxu0 %v2049
    %2367 = vmatprep.subr.bf16.mxu0 0
    %2368 = vmatpush1.bf16.msra.mxu0 %v2050
    %2369 = vmatprep.subr.bf16.mxu0 0
    %2370 = vmatpush1.bf16.msra.mxu0 %v2051
    %2371 = vmatprep.subr.bf16.mxu0 0
    %2372 = vmatpush1.bf16.msra.mxu0 %v2052
    %2373 = vmatprep.mubr.bf16.mxu0 %v1198
    %2374 = vmatmul.mubr.bf16.gmra.mrb[0].mxu0 %v1195
    %v2375 = vpop.f32.mrb[0].mxu0
    %v2376 = vadd.f32 %v2336, %v2375
    %v2377 = vpop.f32.mrb[0].mxu0
    %v2378 = vpop.f32.mrb[0].mxu0
    %v2379 = vpop.f32.mrb[0].mxu0
    %2380 = vdwg.mxu0
    %2381 = vmatprep.subr.bf16.mxu0 0
    %2382 = vmatpush1.bf16.msra.mxu0 %v2053
    %2383 = vmatprep.subr.bf16.mxu0 0
    %2384 = vmatpush1.bf16.msra.mxu0 %v2054
    %2385 = vmatprep.subr.bf16.mxu0 0
    %2386 = vmatpush1.bf16.msra.mxu0 %v2055
    %2387 = vmatprep.subr.bf16.mxu0 0
    %2388 = vmatpush1.bf16.msra.mxu0 %v2056
    %2389 = vmatprep.subr.bf16.mxu0 0
    %2390 = vmatpush1.bf16.msra.mxu0 %v2057
    %2391 = vmatprep.subr.bf16.mxu0 0
    %2392 = vmatpush1.bf16.msra.mxu0 %v2058
    %2393 = vmatprep.subr.bf16.mxu0 0
    %2394 = vmatpush1.bf16.msra.mxu0 %v2059
    %2395 = vmatprep.subr.bf16.mxu0 0
    %2396 = vmatpush1.bf16.msra.mxu0 %v2060
    %2397 = vmatprep.subr.bf16.mxu0 0
    %2398 = vmatpush1.bf16.msra.mxu0 %v2061
    %2399 = vmatprep.subr.bf16.mxu0 0
    %2400 = vmatpush1.bf16.msra.mxu0 %v2062
    %2401 = vmatprep.subr.bf16.mxu0 0
    %2402 = vmatpush1.bf16.msra.mxu0 %v2063
    %2403 = vmatprep.subr.bf16.mxu0 0
    %2404 = vmatpush1.bf16.msra.mxu0 %v2064
    %2405 = vmatprep.subr.bf16.mxu0 0
    %2406 = vmatpush1.bf16.msra.mxu0 %v2065
    %2407 = vmatprep.subr.bf16.mxu0 0
    %2408 = vmatpush1.bf16.msra.mxu0 %v2066
    %2409 = vmatprep.subr.bf16.mxu0 0
    %2410 = vmatpush1.bf16.msra.mxu0 %v2067
    %2411 = vmatprep.subr.bf16.mxu0 0
    %2412 = vmatpush1.bf16.msra.mxu0 %v2068
    %2413 = vmatprep.mubr.bf16.mxu0 %v1204
    %2414 = vmatmul.mubr.bf16.gmra.mrb[0].mxu0 %v1201
    %v2415 = vpop.f32.mrb[0].mxu0
    %v2416 = vadd.f32 %v2376, %v2415
    %v2417 = vpop.f32.mrb[0].mxu0
    %v2418 = vpop.f32.mrb[0].mxu0
    %v2419 = vpop.f32.mrb[0].mxu0
    %2420 = vdwg.mxu0
    %2421 = vmatprep.subr.bf16.mxu0 0
    %2422 = vmatpush1.bf16.msra.mxu0 %v2069
    %2423 = vmatprep.subr.bf16.mxu0 0
    %2424 = vmatpush1.bf16.msra.mxu0 %v2070
    %2425 = vmatprep.subr.bf16.mxu0 0
    %2426 = vmatpush1.bf16.msra.mxu0 %v2071
    %2427 = vmatprep.subr.bf16.mxu0 0
    %2428 = vmatpush1.bf16.msra.mxu0 %v2072
    %2429 = vmatprep.subr.bf16.mxu0 0
    %2430 = vmatpush1.bf16.msra.mxu0 %v2073
    %2431 = vmatprep.subr.bf16.mxu0 0
    %2432 = vmatpush1.bf16.msra.mxu0 %v2074
    %2433 = vmatprep.subr.bf16.mxu0 0
    %2434 = vmatpush1.bf16.msra.mxu0 %v2075
    %2435 = vmatprep.subr.bf16.mxu0 0
    %2436 = vmatpush1.bf16.msra.mxu0 %v2076
    %2437 = vmatprep.subr.bf16.mxu0 0
    %2438 = vmatpush1.bf16.msra.mxu0 %v2077
    %2439 = vmatprep.subr.bf16.mxu0 0
    %2440 = vmatpush1.bf16.msra.mxu0 %v2078
    %2441 = vmatprep.subr.bf16.mxu0 0
    %2442 = vmatpush1.bf16.msra.mxu0 %v2079
    %2443 = vmatprep.subr.bf16.mxu0 0
    %2444 = vmatpush1.bf16.msra.mxu0 %v2080
    %2445 = vmatprep.subr.bf16.mxu0 0
    %2446 = vmatpush1.bf16.msra.mxu0 %v2081
    %2447 = vmatprep.subr.bf16.mxu0 0
    %2448 = vmatpush1.bf16.msra.mxu0 %v2082
    %2449 = vmatprep.subr.bf16.mxu0 0
    %2450 = vmatpush1.bf16.msra.mxu0 %v2083
    %2451 = vmatprep.subr.bf16.mxu0 0
    %2452 = vmatpush1.bf16.msra.mxu0 %v2084
    %2453 = vmatprep.mubr.bf16.mxu0 %v1210
    %2454 = vmatmul.mubr.bf16.gmra.mrb[0].mxu0 %v1207
    %v2455 = vpop.f32.mrb[0].mxu0
    %v2456 = vadd.f32 %v2416, %v2455
    %v2457 = vpop.f32.mrb[0].mxu0
    %v2458 = vpop.f32.mrb[0].mxu0
    %v2459 = vpop.f32.mrb[0].mxu0
    %2460 = vdwg.mxu0
    %2461 = vmatprep.subr.bf16.mxu0 0
    %2462 = vmatpush1.bf16.msra.mxu0 %v2085
    %2463 = vmatprep.subr.bf16.mxu0 0
    %2464 = vmatpush1.bf16.msra.mxu0 %v2086
    %2465 = vmatprep.subr.bf16.mxu0 0
    %2466 = vmatpush1.bf16.msra.mxu0 %v2087
    %2467 = vmatprep.subr.bf16.mxu0 0
    %2468 = vmatpush1.bf16.msra.mxu0 %v2088
    %2469 = vmatprep.subr.bf16.mxu0 0
    %2470 = vmatpush1.bf16.msra.mxu0 %v2089
    %2471 = vmatprep.subr.bf16.mxu0 0
    %2472 = vmatpush1.bf16.msra.mxu0 %v2090
    %2473 = vmatprep.subr.bf16.mxu0 0
    %2474 = vmatpush1.bf16.msra.mxu0 %v2091
    %2475 = vmatprep.subr.bf16.mxu0 0
    %2476 = vmatpush1.bf16.msra.mxu0 %v2092
    %2477 = vmatprep.subr.bf16.mxu0 0
    %2478 = vmatpush1.bf16.msra.mxu0 %v2093
    %2479 = vmatprep.subr.bf16.mxu0 0
    %2480 = vmatpush1.bf16.msra.mxu0 %v2094
    %2481 = vmatprep.subr.bf16.mxu0 0
    %2482 = vmatpush1.bf16.msra.mxu0 %v2095
    %2483 = vmatprep.subr.bf16.mxu0 0
    %2484 = vmatpush1.bf16.msra.mxu0 %v2096
    %2485 = vmatprep.subr.bf16.mxu0 0
    %2486 = vmatpush1.bf16.msra.mxu0 %v2097
    %2487 = vmatprep.subr.bf16.mxu0 0
    %2488 = vmatpush1.bf16.msra.mxu0 %v2098
    %2489 = vmatprep.subr.bf16.mxu0 0
    %2490 = vmatpush1.bf16.msra.mxu0 %v2099
    %2491 = vmatprep.subr.bf16.mxu0 0
    %2492 = vmatpush1.bf16.msra.mxu0 %v2100
    %2493 = vmatprep.mubr.bf16.mxu0 %v1216
    %2494 = vmatmul.mubr.bf16.gmra.mrb[0].mxu0 %v1213
    %v2495 = vpop.f32.mrb[0].mxu0
    %v2496 = vadd.f32 %v2456, %v2495
    %v2497 = vpop.f32.mrb[0].mxu0
    %v2498 = vpop.f32.mrb[0].mxu0
    %v2499 = vpop.f32.mrb[0].mxu0
    %2500 = vdwg.mxu0
    %2501 = vmatprep.subr.bf16.mxu0 0
    %2502 = vmatpush1.bf16.msra.mxu0 %v2101
    %2503 = vmatprep.subr.bf16.mxu0 0
    %2504 = vmatpush1.bf16.msra.mxu0 %v2102
    %2505 = vmatprep.subr.bf16.mxu0 0
    %2506 = vmatpush1.bf16.msra.mxu0 %v2103
    %2507 = vmatprep.subr.bf16.mxu0 0
    %2508 = vmatpush1.bf16.msra.mxu0 %v2104
    %2509 = vmatprep.subr.bf16.mxu0 0
    %2510 = vmatpush1.bf16.msra.mxu0 %v2105
    %2511 = vmatprep.subr.bf16.mxu0 0
    %2512 = vmatpush1.bf16.msra.mxu0 %v2106
    %2513 = vmatprep.subr.bf16.mxu0 0
    %2514 = vmatpush1.bf16.msra.mxu0 %v2107
    %2515 = vmatprep.subr.bf16.mxu0 0
    %2516 = vmatpush1.bf16.msra.mxu0 %v2108
    %2517 = vmatprep.subr.bf16.mxu0 0
    %2518 = vmatpush1.bf16.msra.mxu0 %v2109
    %2519 = vmatprep.subr.bf16.mxu0 0
    %2520 = vmatpush1.bf16.msra.mxu0 %v2110
    %2521 = vmatprep.subr.bf16.mxu0 0
    %2522 = vmatpush1.bf16.msra.mxu0 %v2111
    %2523 = vmatprep.subr.bf16.mxu0 0
    %2524 = vmatpush1.bf16.msra.mxu0 %v2112
    %2525 = vmatprep.subr.bf16.mxu0 0
    %2526 = vmatpush1.bf16.msra.mxu0 %v2113
    %2527 = vmatprep.subr.bf16.mxu0 0
    %2528 = vmatpush1.bf16.msra.mxu0 %v2114
    %2529 = vmatprep.subr.bf16.mxu0 0
    %2530 = vmatpush1.bf16.msra.mxu0 %v2115
    %2531 = vmatprep.subr.bf16.mxu0 0
    %2532 = vmatpush1.bf16.msra.mxu0 %v2116
    %2533 = vmatprep.mubr.bf16.mxu0 %v1222
    %2534 = vmatmul.mubr.bf16.gmra.mrb[0].mxu0 %v1219
    %v2535 = vpop.f32.mrb[0].mxu0
    %v2536 = vadd.f32 %v2496, %v2535
    %v2537 = vpop.f32.mrb[0].mxu0
    %v2538 = vpop.f32.mrb[0].mxu0
    %v2539 = vpop.f32.mrb[0].mxu0
    %2540 = vdwg.mxu0
    %2541 = vmatprep.subr.bf16.mxu0 0
    %2542 = vmatpush1.bf16.msra.mxu0 %v2117
    %2543 = vmatprep.subr.bf16.mxu0 0
    %2544 = vmatpush1.bf16.msra.mxu0 %v2118
    %2545 = vmatprep.subr.bf16.mxu0 0
    %2546 = vmatpush1.bf16.msra.mxu0 %v2119
    %2547 = vmatprep.subr.bf16.mxu0 0
    %2548 = vmatpush1.bf16.msra.mxu0 %v2120
    %2549 = vmatprep.subr.bf16.mxu0 0
    %2550 = vmatpush1.bf16.msra.mxu0 %v2121
    %2551 = vmatprep.subr.bf16.mxu0 0
    %2552 = vmatpush1.bf16.msra.mxu0 %v2122
    %2553 = vmatprep.subr.bf16.mxu0 0
    %2554 = vmatpush1.bf16.msra.mxu0 %v2123
    %2555 = vmatprep.subr.bf16.mxu0 0
    %2556 = vmatpush1.bf16.msra.mxu0 %v2124
    %2557 = vmatprep.subr.bf16.mxu0 0
    %2558 = vmatpush1.bf16.msra.mxu0 %v2125
    %2559 = vmatprep.subr.bf16.mxu0 0
    %2560 = vmatpush1.bf16.msra.mxu0 %v2126
    %2561 = vmatprep.subr.bf16.mxu0 0
    %2562 = vmatpush1.bf16.msra.mxu0 %v2127
    %2563 = vmatprep.subr.bf16.mxu0 0
    %2564 = vmatpush1.bf16.msra.mxu0 %v2128
    %2565 = vmatprep.subr.bf16.mxu0 0
    %2566 = vmatpush1.bf16.msra.mxu0 %v2129
    %2567 = vmatprep.subr.bf16.mxu0 0
    %2568 = vmatpush1.bf16.msra.mxu0 %v2130
    %2569 = vmatprep.subr.bf16.mxu0 0
    %2570 = vmatpush1.bf16.msra.mxu0 %v2131
    %2571 = vmatprep.subr.bf16.mxu0 0
    %2572 = vmatpush1.bf16.msra.mxu0 %v2132
    %2573 = vmatprep.mubr.bf16.mxu0 %v1228
    %2574 = vmatmul.mubr.bf16.gmra.mrb[0].mxu0 %v1225
    %v2575 = vpop.f32.mrb[0].mxu0
    %v2576 = vadd.f32 %v2536, %v2575
    %v2577 = vpop.f32.mrb[0].mxu0
    %v2578 = vpop.f32.mrb[0].mxu0
    %v2579 = vpop.f32.mrb[0].mxu0
    %2580 = vdwg.mxu0
    %v2581 = vmax.f32 %v2576, 0.0
    %v2582 = vld [vmem:[%s3] sm:$0xff]
    %v2583 = vld [vmem:[%s3 + $0x8] sm:$0xff]
    %v2584 = vld [vmem:[%s3 + $0x10] sm:$0xff]
    %v2585 = vld [vmem:[%s3 + $0x18] sm:$0xff]
    %v2586 = vld [vmem:[%s3 + $0x20] sm:$0xff]
    %v2587 = vld [vmem:[%s3 + $0x28] sm:$0xff]
    %v2588 = vld [vmem:[%s3 + $0x30] sm:$0xff]
    %v2589 = vld [vmem:[%s3 + $0x38] sm:$0xff]
    %v2590 = vld [vmem:[%s3 + $0x40] sm:$0xff]
    %v2591 = vld [vmem:[%s3 + $0x48] sm:$0xff]
    %v2592 = vld [vmem:[%s3 + $0x50] sm:$0xff]
    %v2593 = vld [vmem:[%s3 + $0x58] sm:$0xff]
    %v2594 = vld [vmem:[%s3 + $0x60] sm:$0xff]
    %v2595 = vld [vmem:[%s3 + $0x68] sm:$0xff]
    %v2596 = vld [vmem:[%s3 + $0x70] sm:$0xff]
    %v2597 = vld [vmem:[%s3 + $0x78] sm:$0xff]
    %s2598 = scalar_lea.vmem %s3, 128
    %v2599 = vld [vmem:[%s2598] sm:$0xff]
    %v2600 = vld [vmem:[%s2598 + $0x8] sm:$0xff]
    %v2601 = vld [vmem:[%s2598 + $0x10] sm:$0xff]
    %v2602 = vld [vmem:[%s2598 + $0x18] sm:$0xff]
    %v2603 = vld [vmem:[%s2598 + $0x20] sm:$0xff]
    %v2604 = vld [vmem:[%s2598 + $0x28] sm:$0xff]
    %v2605 = vld [vmem:[%s2598 + $0x30] sm:$0xff]
    %v2606 = vld [vmem:[%s2598 + $0x38] sm:$0xff]
    %v2607 = vld [vmem:[%s2598 + $0x40] sm:$0xff]
    %v2608 = vld [vmem:[%s2598 + $0x48] sm:$0xff]
    %v2609 = vld [vmem:[%s2598 + $0x50] sm:$0xff]
    %v2610 = vld [vmem:[%s2598 + $0x58] sm:$0xff]
    %v2611 = vld [vmem:[%s2598 + $0x60] sm:$0xff]
    %v2612 = vld [vmem:[%s2598 + $0x68] sm:$0xff]
    %v2613 = vld [vmem:[%s2598 + $0x70] sm:$0xff]
    %v2614 = vld [vmem:[%s2598 + $0x78] sm:$0xff]
    %v2616 = vrot.slane %v2581, 2
    %2618 = vmatprep.subr.mxu0 0.0
    %2619 = vmatpush1.msra.mxu0 %v2599
    %2620 = vmatprep.subr.mxu0 0.0
    %2621 = vmatpush1.msra.mxu0 %v2600
    %2622 = vmatprep.subr.mxu0 0.0
    %2623 = vmatpush1.msra.mxu0 %v2601
    %2624 = vmatprep.subr.mxu0 0.0
    %2625 = vmatpush1.msra.mxu0 %v2602
    %2626 = vmatprep.subr.mxu0 0.0
    %2627 = vmatpush1.msra.mxu0 %v2603
    %2628 = vmatprep.subr.mxu0 0.0
    %2629 = vmatpush1.msra.mxu0 %v2604
    %2630 = vmatprep.subr.mxu0 0.0
    %2631 = vmatpush1.msra.mxu0 %v2605
    %2632 = vmatprep.subr.mxu0 0.0
    %2633 = vmatpush1.msra.mxu0 %v2606
    %2634 = vmatprep.subr.mxu0 0.0
    %2635 = vmatpush1.msra.mxu0 %v2607
    %2636 = vmatprep.subr.mxu0 0.0
    %2637 = vmatpush1.msra.mxu0 %v2608
    %2638 = vmatprep.subr.mxu0 0.0
    %2639 = vmatpush1.msra.mxu0 %v2609
    %2640 = vmatprep.subr.mxu0 0.0
    %2641 = vmatpush1.msra.mxu0 %v2610
    %2642 = vmatprep.subr.mxu0 0.0
    %2643 = vmatpush1.msra.mxu0 %v2611
    %2644 = vmatprep.subr.mxu0 0.0
    %2645 = vmatpush1.msra.mxu0 %v2612
    %2646 = vmatprep.subr.mxu0 0.0
    %2647 = vmatpush1.msra.mxu0 %v2613
    %2648 = vmatprep.subr.mxu0 0.0
    %2649 = vmatpush1.msra.mxu0 %v2614
    %2650 = vmatprep.subr.mxu0 0.0
    %2651 = vmatpush1.msra.mxu0 0.0
    %2652 = vmatprep.subr.mxu0 0.0
    %2653 = vmatpush1.msra.mxu0 0.0
    %2654 = vmatprep.subr.mxu0 0.0
    %2655 = vmatpush1.msra.mxu0 0.0
    %2656 = vmatprep.subr.mxu0 0.0
    %2657 = vmatpush1.msra.mxu0 0.0
    %2658 = vmatprep.subr.mxu0 0.0
    %2659 = vmatpush1.msra.mxu0 0.0
    %2660 = vmatprep.subr.mxu0 0.0
    %2661 = vmatpush1.msra.mxu0 0.0
    %2662 = vmatprep.subr.mxu0 0.0
    %2663 = vmatpush1.msra.mxu0 0.0
    %2664 = vmatprep.subr.mxu0 0.0
    %2665 = vmatpush1.msra.mxu0 0.0
    %2666 = vmatprep.subr.mxu0 0.0
    %2667 = vmatpush1.msra.mxu0 0.0
    %2668 = vmatprep.subr.mxu0 0.0
    %2669 = vmatpush1.msra.mxu0 0.0
    %2670 = vmatprep.subr.mxu0 0.0
    %2671 = vmatpush1.msra.mxu0 0.0
    %2672 = vmatprep.subr.mxu0 0.0
    %2673 = vmatpush1.msra.mxu0 0.0
    %2674 = vmatprep.subr.mxu0 0.0
    %2675 = vmatpush1.msra.mxu0 0.0
    %2676 = vmatprep.subr.mxu0 0.0
    %2677 = vmatpush1.msra.mxu0 0.0
    %2678 = vmatprep.subr.mxu0 0.0
    %2679 = vmatpush1.msra.mxu0 0.0
    %2680 = vmatprep.subr.mxu0 0.0
    %2681 = vmatpush1.msra.mxu0 0.0
    %2682 = vmatprep.mubr.f32.mxu0 0.0
    %2683 = vmatmul.mubr.f32.gmra.mrb[0].mxu0 %v2616
    %v2684 = vpop.f32.mrb[0].mxu0
    %v2685 = vadd.f32 0.0, %v2684
    %v2686 = vpop.f32.mrb[0].mxu0
    %2687 = vdwg.mxu0
    %2688 = vmatprep.subr.mxu0 0.0
    %2689 = vmatpush1.msra.mxu0 %v2582
    %2690 = vmatprep.subr.mxu0 0.0
    %2691 = vmatpush1.msra.mxu0 %v2583
    %2692 = vmatprep.subr.mxu0 0.0
    %2693 = vmatpush1.msra.mxu0 %v2584
    %2694 = vmatprep.subr.mxu0 0.0
    %2695 = vmatpush1.msra.mxu0 %v2585
    %2696 = vmatprep.subr.mxu0 0.0
    %2697 = vmatpush1.msra.mxu0 %v2586
    %2698 = vmatprep.subr.mxu0 0.0
    %2699 = vmatpush1.msra.mxu0 %v2587
    %2700 = vmatprep.subr.mxu0 0.0
    %2701 = vmatpush1.msra.mxu0 %v2588
    %2702 = vmatprep.subr.mxu0 0.0
    %2703 = vmatpush1.msra.mxu0 %v2589
    %2704 = vmatprep.subr.mxu0 0.0
    %2705 = vmatpush1.msra.mxu0 %v2590
    %2706 = vmatprep.subr.mxu0 0.0
    %2707 = vmatpush1.msra.mxu0 %v2591
    %2708 = vmatprep.subr.mxu0 0.0
    %2709 = vmatpush1.msra.mxu0 %v2592
    %2710 = vmatprep.subr.mxu0 0.0
    %2711 = vmatpush1.msra.mxu0 %v2593
    %2712 = vmatprep.subr.mxu0 0.0
    %2713 = vmatpush1.msra.mxu0 %v2594
    %2714 = vmatprep.subr.mxu0 0.0
    %2715 = vmatpush1.msra.mxu0 %v2595
    %2716 = vmatprep.subr.mxu0 0.0
    %2717 = vmatpush1.msra.mxu0 %v2596
    %2718 = vmatprep.subr.mxu0 0.0
    %2719 = vmatpush1.msra.mxu0 %v2597
    %2720 = vmatprep.subr.mxu0 0.0
    %2721 = vmatpush1.msra.mxu0 0.0
    %2722 = vmatprep.subr.mxu0 0.0
    %2723 = vmatpush1.msra.mxu0 0.0
    %2724 = vmatprep.subr.mxu0 0.0
    %2725 = vmatpush1.msra.mxu0 0.0
    %2726 = vmatprep.subr.mxu0 0.0
    %2727 = vmatpush1.msra.mxu0 0.0
    %2728 = vmatprep.subr.mxu0 0.0
    %2729 = vmatpush1.msra.mxu0 0.0
    %2730 = vmatprep.subr.mxu0 0.0
    %2731 = vmatpush1.msra.mxu0 0.0
    %2732 = vmatprep.subr.mxu0 0.0
    %2733 = vmatpush1.msra.mxu0 0.0
    %2734 = vmatprep.subr.mxu0 0.0
    %2735 = vmatpush1.msra.mxu0 0.0
    %2736 = vmatprep.subr.mxu0 0.0
    %2737 = vmatpush1.msra.mxu0 0.0
    %2738 = vmatprep.subr.mxu0 0.0
    %2739 = vmatpush1.msra.mxu0 0.0
    %2740 = vmatprep.subr.mxu0 0.0
    %2741 = vmatpush1.msra.mxu0 0.0
    %2742 = vmatprep.subr.mxu0 0.0
    %2743 = vmatpush1.msra.mxu0 0.0
    %2744 = vmatprep.subr.mxu0 0.0
    %2745 = vmatpush1.msra.mxu0 0.0
    %2746 = vmatprep.subr.mxu0 0.0
    %2747 = vmatpush1.msra.mxu0 0.0
    %2748 = vmatprep.subr.mxu0 0.0
    %2749 = vmatpush1.msra.mxu0 0.0
    %2750 = vmatprep.subr.mxu0 0.0
    %2751 = vmatpush1.msra.mxu0 0.0
    %2752 = vmatprep.mubr.f32.mxu0 0.0
    %2753 = vmatmul.mubr.f32.gmra.mrb[0].mxu0 %v2581
    %v2754 = vpop.f32.mrb[0].mxu0
    %v2755 = vadd.f32 %v2685, %v2754
    %v2756 = vpop.f32.mrb[0].mxu0
    %2757 = vdwg.mxu0
    %s2758 = scalar_lea.vmem %s3, 256
    %v2759 = vld [vmem:[%s2758] sm:$0xff]
    %v2760 = vld [vmem:[%s2758 + $0x8] sm:$0xff]
    %v2761 = vld [vmem:[%s2758 + $0x10] sm:$0xff]
    %v2762 = vld [vmem:[%s2758 + $0x18] sm:$0xff]
    %v2763 = vld [vmem:[%s2758 + $0x20] sm:$0xff]
    %v2764 = vld [vmem:[%s2758 + $0x28] sm:$0xff]
    %v2765 = vld [vmem:[%s2758 + $0x30] sm:$0xff]
    %v2766 = vld [vmem:[%s2758 + $0x38] sm:$0xff]
    %v2767 = vld [vmem:[%s2758 + $0x40] sm:$0xff]
    %v2768 = vld [vmem:[%s2758 + $0x48] sm:$0xff]
    %v2769 = vld [vmem:[%s2758 + $0x50] sm:$0xff]
    %v2770 = vld [vmem:[%s2758 + $0x58] sm:$0xff]
    %v2771 = vld [vmem:[%s2758 + $0x60] sm:$0xff]
    %v2772 = vld [vmem:[%s2758 + $0x68] sm:$0xff]
    %v2773 = vld [vmem:[%s2758 + $0x70] sm:$0xff]
    %v2774 = vld [vmem:[%s2758 + $0x78] sm:$0xff]
    %v2775 = vrot.slane %v2581, 4
    %2777 = vmatprep.subr.mxu0 0.0
    %2778 = vmatpush1.msra.mxu0 %v2759
    %2779 = vmatprep.subr.mxu0 0.0
    %2780 = vmatpush1.msra.mxu0 %v2760
    %2781 = vmatprep.subr.mxu0 0.0
    %2782 = vmatpush1.msra.mxu0 %v2761
    %2783 = vmatprep.subr.mxu0 0.0
    %2784 = vmatpush1.msra.mxu0 %v2762
    %2785 = vmatprep.subr.mxu0 0.0
    %2786 = vmatpush1.msra.mxu0 %v2763
    %2787 = vmatprep.subr.mxu0 0.0
    %2788 = vmatpush1.msra.mxu0 %v2764
    %2789 = vmatprep.subr.mxu0 0.0
    %2790 = vmatpush1.msra.mxu0 %v2765
    %2791 = vmatprep.subr.mxu0 0.0
    %2792 = vmatpush1.msra.mxu0 %v2766
    %2793 = vmatprep.subr.mxu0 0.0
    %2794 = vmatpush1.msra.mxu0 %v2767
    %2795 = vmatprep.subr.mxu0 0.0
    %2796 = vmatpush1.msra.mxu0 %v2768
    %2797 = vmatprep.subr.mxu0 0.0
    %2798 = vmatpush1.msra.mxu0 %v2769
    %2799 = vmatprep.subr.mxu0 0.0
    %2800 = vmatpush1.msra.mxu0 %v2770
    %2801 = vmatprep.subr.mxu0 0.0
    %2802 = vmatpush1.msra.mxu0 %v2771
    %2803 = vmatprep.subr.mxu0 0.0
    %2804 = vmatpush1.msra.mxu0 %v2772
    %2805 = vmatprep.subr.mxu0 0.0
    %2806 = vmatpush1.msra.mxu0 %v2773
    %2807 = vmatprep.subr.mxu0 0.0
    %2808 = vmatpush1.msra.mxu0 %v2774
    %2809 = vmatprep.subr.mxu0 0.0
    %2810 = vmatpush1.msra.mxu0 0.0
    %2811 = vmatprep.subr.mxu0 0.0
    %2812 = vmatpush1.msra.mxu0 0.0
    %2813 = vmatprep.subr.mxu0 0.0
    %2814 = vmatpush1.msra.mxu0 0.0
    %2815 = vmatprep.subr.mxu0 0.0
    %2816 = vmatpush1.msra.mxu0 0.0
    %2817 = vmatprep.subr.mxu0 0.0
    %2818 = vmatpush1.msra.mxu0 0.0
    %2819 = vmatprep.subr.mxu0 0.0
    %2820 = vmatpush1.msra.mxu0 0.0
    %2821 = vmatprep.subr.mxu0 0.0
    %2822 = vmatpush1.msra.mxu0 0.0
    %2823 = vmatprep.subr.mxu0 0.0
    %2824 = vmatpush1.msra.mxu0 0.0
    %2825 = vmatprep.subr.mxu0 0.0
    %2826 = vmatpush1.msra.mxu0 0.0
    %2827 = vmatprep.subr.mxu0 0.0
    %2828 = vmatpush1.msra.mxu0 0.0
    %2829 = vmatprep.subr.mxu0 0.0
    %2830 = vmatpush1.msra.mxu0 0.0
    %2831 = vmatprep.subr.mxu0 0.0
    %2832 = vmatpush1.msra.mxu0 0.0
    %2833 = vmatprep.subr.mxu0 0.0
    %2834 = vmatpush1.msra.mxu0 0.0
    %2835 = vmatprep.subr.mxu0 0.0
    %2836 = vmatpush1.msra.mxu0 0.0
    %2837 = vmatprep.subr.mxu0 0.0
    %2838 = vmatpush1.msra.mxu0 0.0
    %2839 = vmatprep.subr.mxu0 0.0
    %2840 = vmatpush1.msra.mxu0 0.0
    %2841 = vmatprep.mubr.f32.mxu0 0.0
    %2842 = vmatmul.mubr.f32.gmra.mrb[0].mxu0 %v2775
    %v2843 = vpop.f32.mrb[0].mxu0
    %v2844 = vadd.f32 0.0, %v2843
    %v2845 = vpop.f32.mrb[0].mxu0
    %2846 = vdwg.mxu0
    %v2847 = vadd.f32 %v2755, %v2844
    %s2848 = scalar_lea.vmem %s3, 384
    %v2849 = vld [vmem:[%s2848] sm:$0xff]
    %v2850 = vld [vmem:[%s2848 + $0x8] sm:$0xff]
    %v2851 = vld [vmem:[%s2848 + $0x10] sm:$0xff]
    %v2852 = vld [vmem:[%s2848 + $0x18] sm:$0xff]
    %v2853 = vld [vmem:[%s2848 + $0x20] sm:$0xff]
    %v2854 = vld [vmem:[%s2848 + $0x28] sm:$0xff]
    %v2855 = vld [vmem:[%s2848 + $0x30] sm:$0xff]
    %v2856 = vld [vmem:[%s2848 + $0x38] sm:$0xff]
    %v2857 = vld [vmem:[%s2848 + $0x40] sm:$0xff]
    %v2858 = vld [vmem:[%s2848 + $0x48] sm:$0xff]
    %v2859 = vld [vmem:[%s2848 + $0x50] sm:$0xff]
    %v2860 = vld [vmem:[%s2848 + $0x58] sm:$0xff]
    %v2861 = vld [vmem:[%s2848 + $0x60] sm:$0xff]
    %v2862 = vld [vmem:[%s2848 + $0x68] sm:$0xff]
    %v2863 = vld [vmem:[%s2848 + $0x70] sm:$0xff]
    %v2864 = vld [vmem:[%s2848 + $0x78] sm:$0xff]
    %v2865 = vrot.slane %v2581, 6
    %2867 = vmatprep.subr.mxu0 0.0
    %2868 = vmatpush1.msra.mxu0 %v2849
    %2869 = vmatprep.subr.mxu0 0.0
    %2870 = vmatpush1.msra.mxu0 %v2850
    %2871 = vmatprep.subr.mxu0 0.0
    %2872 = vmatpush1.msra.mxu0 %v2851
    %2873 = vmatprep.subr.mxu0 0.0
    %2874 = vmatpush1.msra.mxu0 %v2852
    %2875 = vmatprep.subr.mxu0 0.0
    %2876 = vmatpush1.msra.mxu0 %v2853
    %2877 = vmatprep.subr.mxu0 0.0
    %2878 = vmatpush1.msra.mxu0 %v2854
    %2879 = vmatprep.subr.mxu0 0.0
    %2880 = vmatpush1.msra.mxu0 %v2855
    %2881 = vmatprep.subr.mxu0 0.0
    %2882 = vmatpush1.msra.mxu0 %v2856
    %2883 = vmatprep.subr.mxu0 0.0
    %2884 = vmatpush1.msra.mxu0 %v2857
    %2885 = vmatprep.subr.mxu0 0.0
    %2886 = vmatpush1.msra.mxu0 %v2858
    %2887 = vmatprep.subr.mxu0 0.0
    %2888 = vmatpush1.msra.mxu0 %v2859
    %2889 = vmatprep.subr.mxu0 0.0
    %2890 = vmatpush1.msra.mxu0 %v2860
    %2891 = vmatprep.subr.mxu0 0.0
    %2892 = vmatpush1.msra.mxu0 %v2861
    %2893 = vmatprep.subr.mxu0 0.0
    %2894 = vmatpush1.msra.mxu0 %v2862
    %2895 = vmatprep.subr.mxu0 0.0
    %2896 = vmatpush1.msra.mxu0 %v2863
    %2897 = vmatprep.subr.mxu0 0.0
    %2898 = vmatpush1.msra.mxu0 %v2864
    %2899 = vmatprep.subr.mxu0 0.0
    %2900 = vmatpush1.msra.mxu0 0.0
    %2901 = vmatprep.subr.mxu0 0.0
    %2902 = vmatpush1.msra.mxu0 0.0
    %2903 = vmatprep.subr.mxu0 0.0
    %2904 = vmatpush1.msra.mxu0 0.0
    %2905 = vmatprep.subr.mxu0 0.0
    %2906 = vmatpush1.msra.mxu0 0.0
    %2907 = vmatprep.subr.mxu0 0.0
    %2908 = vmatpush1.msra.mxu0 0.0
    %2909 = vmatprep.subr.mxu0 0.0
    %2910 = vmatpush1.msra.mxu0 0.0
    %2911 = vmatprep.subr.mxu0 0.0
    %2912 = vmatpush1.msra.mxu0 0.0
    %2913 = vmatprep.subr.mxu0 0.0
    %2914 = vmatpush1.msra.mxu0 0.0
    %2915 = vmatprep.subr.mxu0 0.0
    %2916 = vmatpush1.msra.mxu0 0.0
    %2917 = vmatprep.subr.mxu0 0.0
    %2918 = vmatpush1.msra.mxu0 0.0
    %2919 = vmatprep.subr.mxu0 0.0
    %2920 = vmatpush1.msra.mxu0 0.0
    %2921 = vmatprep.subr.mxu0 0.0
    %2922 = vmatpush1.msra.mxu0 0.0
    %2923 = vmatprep.subr.mxu0 0.0
    %2924 = vmatpush1.msra.mxu0 0.0
    %2925 = vmatprep.subr.mxu0 0.0
    %2926 = vmatpush1.msra.mxu0 0.0
    %2927 = vmatprep.subr.mxu0 0.0
    %2928 = vmatpush1.msra.mxu0 0.0
    %2929 = vmatprep.subr.mxu0 0.0
    %2930 = vmatpush1.msra.mxu0 0.0
    %2931 = vmatprep.mubr.f32.mxu0 0.0
    %2932 = vmatmul.mubr.f32.gmra.mrb[0].mxu0 %v2865
    %v2933 = vpop.f32.mrb[0].mxu0
    %v2934 = vadd.f32 0.0, %v2933
    %v2935 = vpop.f32.mrb[0].mxu0
    %2936 = vdwg.mxu0
    %v2937 = vadd.f32 %v2847, %v2934
    %v2938 = vld [vmem:[%s4] sm:$0x1]
    %v2940 = vlaneseq
    %v2941 = vshrl.u32 %v2940, 7
    %v2942 = vsub.s32 0, %v2941
    %v2943 = vrot.slane %v2938, %v2942
    %v2945 = vadd.f32 %v2937, %v2943
    %v2946 = vmax.f32 %v2945, 0.0
    %v2947 = vld [vmem:[%s5] sm:$0xff]
    %v2948 = vld [vmem:[%s5 + $0x8] sm:$0xff]
    %v2949 = vld [vmem:[%s5 + $0x10] sm:$0xff]
    %v2950 = vld [vmem:[%s5 + $0x18] sm:$0xff]
    %v2951 = vld [vmem:[%s6] sm:$0x1]
    %v2953 = vlaneseq
    %v2954 = vshrl.u32 %v2953, 7
    %v2955 = vsub.s32 0, %v2954
    %v2956 = vrot.slane %v2951, %v2955
    %vm2958 = vcmask 261120
    %v2960 = vsel %vm2958, %v2946, 0
    %2962 = vmatprep.subr.mxu0 0.0
    %2963 = vmatpush1.msra.mxu0 %v2947
    %2964 = vmatprep.subr.mxu0 0.0
    %2965 = vmatpush1.msra.mxu0 %v2948
    %2966 = vmatprep.subr.mxu0 0.0
    %2967 = vmatpush1.msra.mxu0 %v2949
    %2968 = vmatprep.subr.mxu0 0.0
    %2969 = vmatpush1.msra.mxu0 %v2950
    %2970 = vmatprep.subr.mxu0 0.0
    %2971 = vmatpush1.msra.mxu0 0.0
    %2972 = vmatprep.subr.mxu0 0.0
    %2973 = vmatpush1.msra.mxu0 0.0
    %2974 = vmatprep.subr.mxu0 0.0
    %2975 = vmatpush1.msra.mxu0 0.0
    %2976 = vmatprep.subr.mxu0 0.0
    %2977 = vmatpush1.msra.mxu0 0.0
    %2978 = vmatprep.subr.mxu0 0.0
    %2979 = vmatpush1.msra.mxu0 0.0
    %2980 = vmatprep.subr.mxu0 0.0
    %2981 = vmatpush1.msra.mxu0 0.0
    %2982 = vmatprep.subr.mxu0 0.0
    %2983 = vmatpush1.msra.mxu0 0.0
    %2984 = vmatprep.subr.mxu0 0.0
    %2985 = vmatpush1.msra.mxu0 0.0
    %2986 = vmatprep.subr.mxu0 0.0
    %2987 = vmatpush1.msra.mxu0 0.0
    %2988 = vmatprep.subr.mxu0 0.0
    %2989 = vmatpush1.msra.mxu0 0.0
    %2990 = vmatprep.subr.mxu0 0.0
    %2991 = vmatpush1.msra.mxu0 0.0
    %2992 = vmatprep.subr.mxu0 0.0
    %2993 = vmatpush1.msra.mxu0 0.0
    %2994 = vmatprep.subr.mxu0 0.0
    %2995 = vmatpush1.msra.mxu0 0.0
    %2996 = vmatprep.subr.mxu0 0.0
    %2997 = vmatpush1.msra.mxu0 0.0
    %2998 = vmatprep.subr.mxu0 0.0
    %2999 = vmatpush1.msra.mxu0 0.0
    %3000 = vmatprep.subr.mxu0 0.0
    %3001 = vmatpush1.msra.mxu0 0.0
    %3002 = vmatprep.subr.mxu0 0.0
    %3003 = vmatpush1.msra.mxu0 0.0
    %3004 = vmatprep.subr.mxu0 0.0
    %3005 = vmatpush1.msra.mxu0 0.0
    %3006 = vmatprep.subr.mxu0 0.0
    %3007 = vmatpush1.msra.mxu0 0.0
    %3008 = vmatprep.subr.mxu0 0.0
    %3009 = vmatpush1.msra.mxu0 0.0
    %3010 = vmatprep.subr.mxu0 0.0
    %3011 = vmatpush1.msra.mxu0 0.0
    %3012 = vmatprep.subr.mxu0 0.0
    %3013 = vmatpush1.msra.mxu0 0.0
    %3014 = vmatprep.subr.mxu0 0.0
    %3015 = vmatpush1.msra.mxu0 0.0
    %3016 = vmatprep.subr.mxu0 0.0
    %3017 = vmatpush1.msra.mxu0 0.0
    %3018 = vmatprep.subr.mxu0 0.0
    %3019 = vmatpush1.msra.mxu0 0.0
    %3020 = vmatprep.subr.mxu0 0.0
    %3021 = vmatpush1.msra.mxu0 0.0
    %3022 = vmatprep.subr.mxu0 0.0
    %3023 = vmatpush1.msra.mxu0 0.0
    %3024 = vmatprep.subr.mxu0 0.0
    %3025 = vmatpush1.msra.mxu0 0.0
    %3026 = vmatprep.mubr.f32.mxu0 0.0
    %3027 = vmatmul.mubr.f32.gmra.mrb[0].mxu0 %v2960
    %v3028 = vpop.f32.mrb[0].mxu0
    %v3029 = vadd.f32 %v2956, %v3028
    %v3030 = vpop.f32.mrb[0].mxu0
    %3031 = vdwg.mxu0
    %3032 = vst [vmem:[#allocation5] sm:$0x3] %v3029
    // Predicated region
    $region34: #{tpu_custom_call.1} parent=1 // pred_check
      _
    $region35: #{tpu_custom_call.1} parent=1 // pred_check_branch
      %3034 = sbr.rel (0) target = $region37
    $region36: #{tpu_custom_call.1} parent=1 // pred_region
      %s3036 = ssub.s32 32, 32
      %3037 = vsyncadd [#allocation4], %s3036
      %s3039 = sshll.u32 [#allocation5], 4
      %s3040 = int_to_ptr.vmem [resolvable:$true] %s3039
      %3042 = dma.vmem_to_hbm [thread:$0]  %s3040, 32, %s7, [#allocation4]
    $region37: #{tpu_custom_call.1} parent=1 // pred_fallthru
      _
    // Predicated region
    $region38: #{tpu_custom_call.1} parent=1 // pred_check
      _
    $region39: #{tpu_custom_call.1} parent=1 // pred_check_branch
      %3044 = sbr.rel (0) target = $region41
    $region40: #{tpu_custom_call.1} parent=1 // pred_region
      %3045 = dma.done [#allocation4], 32
    $region41: #{tpu_custom_call.1} parent=1 // pred_fallthru
      _
    %3046 = vsyncpa [#allocation3], 1
    %3047 = vsyncpa [#allocation4], 1

</llo_original>
